<compile_context>
chip_gen: v7x
topology: tpu7x:2x2x1
jax: 0.10.0
libtpu: 0.0.40
codegen_flags: <defaults>
</compile_context>

<pallas_src>
import math

import jax
import jax.numpy as jnp
from jax.experimental import pallas as pl
from jax.experimental.pallas import tpu as pltpu

# ----------------------------- config ---------------------------------------
BATCH     = 2
SEQ       = 8
HIDDEN    = 32
NUM_HEADS = 4
HEAD_DIM  = HIDDEN // NUM_HEADS      # 8
FFN       = 64
EPS       = 1e-5
NEG_INF   = -1e9
SQRT1_2   = 1.0 / math.sqrt(2.0)


# ----------------------------- kernel ---------------------------------------
def _gelu_exact(u):
    """Exact (erf-based) GELU, matching torch.nn.GELU() defaults.

    erf approximated with Abramowitz & Stegun 7.1.26 (max abs err ~1.5e-7),
    built only from exp / mul / add / where so it lowers cleanly on TPU.
    """
    z = u * SQRT1_2
    az = jnp.abs(z)
    t = 1.0 / (1.0 + 0.3275911 * az)
    poly = ((((1.061405429 * t - 1.453152027) * t + 1.421413741) * t
             - 0.284496736) * t + 0.254829592) * t
    erf_az = 1.0 - poly * jnp.exp(-az * az)
    erf_z = jnp.where(z >= 0.0, erf_az, -erf_az)
    return 0.5 * u * (1.0 + erf_z)


def transformer_block_kernel(
    x_ref,       # (BS, H)  f32  hidden states, batch folded into rows
    bias_ref,    # (BS, BS) f32  additive attention bias (key mask + block-diag batch)
    tmask_ref,   # (BS, 1)  f32  multiplicative token mask
    wqkv_ref,    # (H, 3H)  bf16 fused QKV weight
    wo_ref,      # (H, H)   bf16
    wu_ref,      # (H, F)   bf16
    wd_ref,      # (F, H)   bf16
    vecs_ref,    # (6, H)   f32  [g1, be1, g2, be2, bo, bd]
    bqkv_ref,    # (1, 3H)  f32
    bu_ref,      # (1, F)   f32
    out_ref,     # (BS, H)  f32
):
    f32 = jnp.float32
    bf16 = jnp.bfloat16

    x    = x_ref[...]
    tm   = tmask_ref[...]
    bias = bias_ref[...]

    vecs = vecs_ref[...]
    g1, be1 = vecs[0:1, :], vecs[1:2, :]
    g2, be2 = vecs[2:3, :], vecs[3:4, :]
    bo,  bd = vecs[4:5, :], vecs[5:6, :]

    def layernorm(h, g, b):
        mu  = jnp.mean(h, axis=-1, keepdims=True)
        d   = h - mu
        var = jnp.mean(d * d, axis=-1, keepdims=True)
        return d * jax.lax.rsqrt(var + EPS) * g + b

    # ---- input layernorm + self attention -----------------------------------
    hn = layernorm(x, g1, be1)

    # fused QKV projection: one (BS, H) @ (H, 3H) matmul on the MXU (bf16 in,
    # f32 accumulate)
    qkv = jnp.dot(hn.astype(bf16), wqkv_ref[...],
                  preferred_element_type=f32) + bqkv_ref[...]        # (BS, 3H) f32

    scale = 1.0 / math.sqrt(HEAD_DIM)
    acc = jnp.zeros(x.shape, f32)                                    # (BS, H)
    for h in range(NUM_HEADS):                                       # static unroll
        lo = h * HEAD_DIM
        qh = qkv[:, lo:lo + HEAD_DIM].astype(bf16)                   # (BS, Dh)
        kh = qkv[:, HIDDEN + lo:HIDDEN + lo + HEAD_DIM].astype(bf16)
        vh = qkv[:, 2 * HIDDEN + lo:2 * HIDDEN + lo + HEAD_DIM].astype(bf16)

        # q @ k^T without an explicit transpose op; f32 scores.
        s = jax.lax.dot_general(qh, kh, (((1,), (1,)), ((), ())),
                                preferred_element_type=f32)          # (BS, BS)
        s = s * scale + bias                                         # mask + batch block-diag
        s = s - jnp.max(s, axis=-1, keepdims=True)
        p = jnp.exp(s)
        p = p * pl.reciprocal(jnp.sum(p, axis=-1, keepdims=True), approx=True)

        ctx = jnp.dot(p.astype(bf16), vh, preferred_element_type=f32)  # (BS, Dh)
        # accumulate directly through the matching wo row-slice (no concat)
        acc = acc + jnp.dot(ctx.astype(bf16), wo_ref[lo:lo + HEAD_DIM, :],
                            preferred_element_type=f32)               # (BS, H)

    h1 = (x + acc + bo) * tm                                         # residual + mask

    # ---- post-attention layernorm + MLP --------------------------------------
    hn2 = layernorm(h1, g2, be2)
    up  = jnp.dot(hn2.astype(bf16), wu_ref[...],
                  preferred_element_type=f32) + bu_ref[...]
    up  = _gelu_exact(up)
    dn  = jnp.dot(up.astype(bf16), wd_ref[...],
                  preferred_element_type=f32) + bd

    out_ref[...] = (h1 + dn) * tm                                    # residual + mask


# ----------------------------- wrapper ---------------------------------------
def transformer_block(x, attention_mask, params):
    """x: (B, S, H) f32. attention_mask: (B, S) 0/1. params: dict of f32 arrays."""
    B, S, H = x.shape
    BS = B * S

    x2d = x.reshape(BS, H)
    m = attention_mask.astype(jnp.float32)                       # (B, S)
    tmask = m.reshape(BS, 1)                                     # per-token mask

    # additive attention bias: 0 where (same batch AND key valid), else -1e9.
    same_batch = jnp.kron(jnp.eye(B, dtype=jnp.float32),
                          jnp.ones((S, S), jnp.float32))         # (BS, BS)
    bias = (1.0 - same_batch * m.reshape(1, BS)) * NEG_INF       # (BS, BS)

    p = params
    wqkv = jnp.concatenate([p["wq"], p["wk"], p["wv"]], axis=1).astype(jnp.bfloat16)
    bqkv = jnp.concatenate([p["bq"], p["bk"], p["bv"]], axis=1)
    wo = p["wo"].astype(jnp.bfloat16)
    wu = p["wu"].astype(jnp.bfloat16)
    wd = p["wd"].astype(jnp.bfloat16)
    vecs = jnp.concatenate(
        [p["g1"], p["be1"], p["g2"], p["be2"], p["bo"], p["bd"]], axis=0)  # (6, H)
    bu = p["bu"]

    n_inputs = 10
    vmem = pl.BlockSpec(memory_space=pltpu.MemorySpace.VMEM)

    out2d = pl.pallas_call(
        transformer_block_kernel,
        out_shape=jax.ShapeDtypeStruct((BS, H), jnp.float32),
        in_specs=[vmem] * n_inputs,
        out_specs=pl.BlockSpec(memory_space=pltpu.MemorySpace.VMEM),
    )(x2d, bias, tmask, wqkv, wo, wu, wd, vecs, bqkv, bu)

    return out2d.reshape(B, S, H)


# ----------------------------- reference (pure JAX, f32) ----------------------
def reference_block(x, mask, p):
    def ln(h, g, b):
        mu = jnp.mean(h, axis=-1, keepdims=True)
        var = jnp.mean((h - mu) ** 2, axis=-1, keepdims=True)
        return (h - mu) * jax.lax.rsqrt(var + EPS) * g + b

    B, S, H = x.shape
    hn = ln(x, p["g1"], p["be1"])
    q = hn @ p["wq"] + p["bq"]
    k = hn @ p["wk"] + p["bk"]
    v = hn @ p["wv"] + p["bv"]
    q = q.reshape(B, S, NUM_HEADS, HEAD_DIM).transpose(0, 2, 1, 3)
    k = k.reshape(B, S, NUM_HEADS, HEAD_DIM).transpose(0, 2, 1, 3)
    v = v.reshape(B, S, NUM_HEADS, HEAD_DIM).transpose(0, 2, 1, 3)
    s = jnp.einsum("bhqd,bhkd->bhqk", q, k) / math.sqrt(HEAD_DIM)
    s = s + (1.0 - mask[:, None, None, :]) * NEG_INF
    pr = jax.nn.softmax(s, axis=-1)
    a = jnp.einsum("bhqk,bhkd->bhqd", pr, v).transpose(0, 2, 1, 3).reshape(B, S, H)
    a = a @ p["wo"] + p["bo"]
    h1 = (x + a) * mask[:, :, None]
    hn2 = ln(h1, p["g2"], p["be2"])
    up = jax.nn.gelu(hn2 @ p["wu"] + p["bu"], approximate=False)   # exact erf GELU
    dn = up @ p["wd"] + p["bd"]
    return (h1 + dn) * mask[:, :, None]


# ----------------------------- main -------------------------------------------
if __name__ == "__main__":
    key = jax.random.PRNGKey(0)
    ks = jax.random.split(key, 20)

    def w(k, shape, scale):
        return jax.random.normal(k, shape, dtype=jnp.float32) * scale

    params = {
        "wq": w(ks[0], (HIDDEN, HIDDEN), 0.08), "bq": w(ks[10], (1, HIDDEN), 0.02),
        "wk": w(ks[1], (HIDDEN, HIDDEN), 0.08), "bk": w(ks[11], (1, HIDDEN), 0.02),
        "wv": w(ks[2], (HIDDEN, HIDDEN), 0.08), "bv": w(ks[12], (1, HIDDEN), 0.02),
        "wo": w(ks[3], (HIDDEN, HIDDEN), 0.08), "bo": w(ks[4],  (1, HIDDEN), 0.02),
        "wu": w(ks[5], (HIDDEN, FFN),    0.08), "bu": w(ks[6],  (1, FFN),    0.02),
        "wd": w(ks[7], (FFN, HIDDEN),    0.08), "bd": w(ks[8],  (1, HIDDEN), 0.02),
        "g1": 1.0 + 0.05 * jax.random.normal(ks[13], (1, HIDDEN), dtype=jnp.float32),
        "be1": w(ks[14], (1, HIDDEN), 0.02),
        "g2": 1.0 + 0.05 * jax.random.normal(ks[15], (1, HIDDEN), dtype=jnp.float32),
        "be2": w(ks[16], (1, HIDDEN), 0.02),
    }

    x = jax.random.normal(ks[9], (BATCH, SEQ, HIDDEN), dtype=jnp.float32)
    # padding-style mask: batch 0 fully valid, batch 1 has last 2 tokens masked
    attention_mask = jnp.array(
        [[1.0] * SEQ, [1.0] * (SEQ - 2) + [0.0, 0.0]], dtype=jnp.float32
    )

    run = jax.jit(transformer_block)
    out = jax.block_until_ready(run(x, attention_mask, params))

    ref = reference_block(x, attention_mask, params)
    assert out.shape == (BATCH, SEQ, HIDDEN)
    max_err = float(jnp.max(jnp.abs(out - ref)))
    # bf16 matmul operands vs. f32 reference -> a few 1e-3 absolute error.
    assert max_err < 5e-2, f"max abs err = {max_err}"
    print("KERNEL_OK")
</pallas_src>

<mosaic_0001>
module attributes {stable_mosaic.version = 11 : i64} {
  func.func @transformer_block_kernel(%arg0: memref<16x32xf32, #tpu.memory_space<vmem>>, %arg1: memref<16x16xf32, #tpu.memory_space<vmem>>, %arg2: memref<16x1xf32, #tpu.memory_space<vmem>>, %arg3: memref<32x96xbf16, #tpu.memory_space<vmem>>, %arg4: memref<32x32xbf16, #tpu.memory_space<vmem>>, %arg5: memref<32x64xbf16, #tpu.memory_space<vmem>>, %arg6: memref<64x32xbf16, #tpu.memory_space<vmem>>, %arg7: memref<6x32xf32, #tpu.memory_space<vmem>>, %arg8: memref<1x96xf32, #tpu.memory_space<vmem>>, %arg9: memref<1x64xf32, #tpu.memory_space<vmem>>, %arg10: memref<16x32xf32, #tpu.memory_space<vmem>>) attributes {dimension_semantics = [], scalar_prefetch = 0 : i64, scratch_operands = 0 : i64, tpu.core_type = #tpu.core_type<tc>} {
    %c0 = arith.constant 0 : index
    %c0_0 = arith.constant 0 : index
    %0 = vector.load %arg0[%c0, %c0_0] : memref<16x32xf32, #tpu.memory_space<vmem>>, vector<16x32xf32>
    %c0_1 = arith.constant 0 : index
    %c0_2 = arith.constant 0 : index
    %1 = vector.load %arg2[%c0_1, %c0_2] : memref<16x1xf32, #tpu.memory_space<vmem>>, vector<16x1xf32>
    %c0_3 = arith.constant 0 : index
    %c0_4 = arith.constant 0 : index
    %2 = vector.load %arg1[%c0_3, %c0_4] : memref<16x16xf32, #tpu.memory_space<vmem>>, vector<16x16xf32>
    %c0_5 = arith.constant 0 : index
    %c0_6 = arith.constant 0 : index
    %3 = vector.load %arg7[%c0_5, %c0_6] : memref<6x32xf32, #tpu.memory_space<vmem>>, vector<6x32xf32>
    %4 = vector.extract_strided_slice %3 {offsets = [0, 0], sizes = [1, 32], strides = [1, 1]} : vector<6x32xf32> to vector<1x32xf32>
    %5 = vector.extract_strided_slice %3 {offsets = [1, 0], sizes = [1, 32], strides = [1, 1]} : vector<6x32xf32> to vector<1x32xf32>
    %6 = vector.extract_strided_slice %3 {offsets = [2, 0], sizes = [1, 32], strides = [1, 1]} : vector<6x32xf32> to vector<1x32xf32>
    %7 = vector.extract_strided_slice %3 {offsets = [3, 0], sizes = [1, 32], strides = [1, 1]} : vector<6x32xf32> to vector<1x32xf32>
    %8 = vector.extract_strided_slice %3 {offsets = [4, 0], sizes = [1, 32], strides = [1, 1]} : vector<6x32xf32> to vector<1x32xf32>
    %9 = vector.extract_strided_slice %3 {offsets = [5, 0], sizes = [1, 32], strides = [1, 1]} : vector<6x32xf32> to vector<1x32xf32>
    %cst = arith.constant dense<0.000000e+00> : vector<16xf32>
    %10 = vector.multi_reduction <add>, %0, %cst [1] : vector<16x32xf32> to vector<16xf32>
    %11 = vector.shape_cast %10 : vector<16xf32> to vector<16x1xf32>
    %cst_7 = arith.constant 3.200000e+01 : f32
    %12 = vector.broadcast %cst_7 : f32 to vector<16x1xf32>
    %13 = arith.divf %11, %12 : vector<16x1xf32>
    %14 = vector.broadcast %13 : vector<16x1xf32> to vector<16x32xf32>
    %15 = arith.subf %0, %14 : vector<16x32xf32>
    %16 = arith.mulf %15, %15 : vector<16x32xf32>
    %cst_8 = arith.constant dense<0.000000e+00> : vector<16xf32>
    %17 = vector.multi_reduction <add>, %16, %cst_8 [1] : vector<16x32xf32> to vector<16xf32>
    %18 = vector.shape_cast %17 : vector<16xf32> to vector<16x1xf32>
    %cst_9 = arith.constant 3.200000e+01 : f32
    %19 = vector.broadcast %cst_9 : f32 to vector<16x1xf32>
    %20 = arith.divf %18, %19 : vector<16x1xf32>
    %cst_10 = arith.constant 9.99999974E-6 : f32
    %21 = vector.broadcast %cst_10 : f32 to vector<16x1xf32>
    %22 = arith.addf %20, %21 : vector<16x1xf32>
    %23 = math.rsqrt %22 : vector<16x1xf32>
    %24 = vector.broadcast %23 : vector<16x1xf32> to vector<16x32xf32>
    %25 = arith.mulf %15, %24 : vector<16x32xf32>
    %26 = vector.broadcast %4 : vector<1x32xf32> to vector<16x32xf32>
    %27 = arith.mulf %25, %26 : vector<16x32xf32>
    %28 = vector.broadcast %5 : vector<1x32xf32> to vector<16x32xf32>
    %29 = arith.addf %27, %28 : vector<16x32xf32>
    %30 = arith.truncf %29 : vector<16x32xf32> to vector<16x32xbf16>
    %c0_11 = arith.constant 0 : index
    %c0_12 = arith.constant 0 : index
    %31 = vector.load %arg3[%c0_11, %c0_12] : memref<32x96xbf16, #tpu.memory_space<vmem>>, vector<32x96xbf16>
    %cst_13 = arith.constant dense<0.000000e+00> : vector<16x96xf32>
    %32 = tpu.matmul %30, %31, %cst_13 {dimension_numbers = #tpu.dot_dimension_numbers<[1], [0], [0], [1], [0, 0, 1, 1], [], []>} : vector<16x32xbf16>, vector<32x96xbf16>, vector<16x96xf32> -> vector<16x96xf32>
    %c0_14 = arith.constant 0 : index
    %c0_15 = arith.constant 0 : index
    %33 = vector.load %arg8[%c0_14, %c0_15] : memref<1x96xf32, #tpu.memory_space<vmem>>, vector<1x96xf32>
    %34 = vector.broadcast %33 : vector<1x96xf32> to vector<16x96xf32>
    %35 = arith.addf %32, %34 : vector<16x96xf32>
    %cst_16 = arith.constant 0.000000e+00 : f32
    %36 = vector.broadcast %cst_16 : f32 to vector<16x32xf32>
    %37 = vector.extract_strided_slice %35 {offsets = [0, 0], sizes = [16, 8], strides = [1, 1]} : vector<16x96xf32> to vector<16x8xf32>
    %38 = arith.truncf %37 : vector<16x8xf32> to vector<16x8xbf16>
    %39 = vector.extract_strided_slice %35 {offsets = [0, 32], sizes = [16, 8], strides = [1, 1]} : vector<16x96xf32> to vector<16x8xf32>
    %40 = arith.truncf %39 : vector<16x8xf32> to vector<16x8xbf16>
    %41 = vector.extract_strided_slice %35 {offsets = [0, 64], sizes = [16, 8], strides = [1, 1]} : vector<16x96xf32> to vector<16x8xf32>
    %42 = arith.truncf %41 : vector<16x8xf32> to vector<16x8xbf16>
    %cst_17 = arith.constant dense<0.000000e+00> : vector<16x16xf32>
    %43 = tpu.matmul %38, %40, %cst_17 {dimension_numbers = #tpu.dot_dimension_numbers<[1], [1], [0], [0], [0, 0, 1, 0], [], []>} : vector<16x8xbf16>, vector<16x8xbf16>, vector<16x16xf32> -> vector<16x16xf32>
    %cst_18 = arith.constant 0.353553385 : f32
    %44 = vector.broadcast %cst_18 : f32 to vector<16x16xf32>
    %45 = arith.mulf %43, %44 : vector<16x16xf32>
    %46 = arith.addf %45, %2 : vector<16x16xf32>
    %cst_19 = arith.constant dense<0xFF800000> : vector<16xf32>
    %47 = vector.multi_reduction <maximumf>, %46, %cst_19 [1] : vector<16x16xf32> to vector<16xf32>
    %48 = vector.shape_cast %47 : vector<16xf32> to vector<16x1xf32>
    %49 = vector.broadcast %48 : vector<16x1xf32> to vector<16x16xf32>
    %50 = arith.subf %46, %49 : vector<16x16xf32>
    %51 = math.exp %50 : vector<16x16xf32>
    %cst_20 = arith.constant dense<0.000000e+00> : vector<16xf32>
    %52 = vector.multi_reduction <add>, %51, %cst_20 [1] : vector<16x16xf32> to vector<16xf32>
    %53 = vector.shape_cast %52 : vector<16xf32> to vector<16x1xf32>
    %54 = tpu.reciprocal %53 {approx = true} : vector<16x1xf32> -> vector<16x1xf32>
    %55 = vector.broadcast %54 : vector<16x1xf32> to vector<16x16xf32>
    %56 = arith.mulf %51, %55 : vector<16x16xf32>
    %57 = arith.truncf %56 : vector<16x16xf32> to vector<16x16xbf16>
    %cst_21 = arith.constant dense<0.000000e+00> : vector<16x8xf32>
    %58 = tpu.matmul %57, %42, %cst_21 {dimension_numbers = #tpu.dot_dimension_numbers<[1], [0], [0], [1], [0, 0, 1, 1], [], []>} : vector<16x16xbf16>, vector<16x8xbf16>, vector<16x8xf32> -> vector<16x8xf32>
    %59 = arith.truncf %58 : vector<16x8xf32> to vector<16x8xbf16>
    %c0_22 = arith.constant 0 : index
    %c0_23 = arith.constant 0 : index
    %60 = vector.load %arg4[%c0_22, %c0_23] : memref<32x32xbf16, #tpu.memory_space<vmem>>, vector<8x32xbf16>
    %cst_24 = arith.constant dense<0.000000e+00> : vector<16x32xf32>
    %61 = tpu.matmul %59, %60, %cst_24 {dimension_numbers = #tpu.dot_dimension_numbers<[1], [0], [0], [1], [0, 0, 1, 1], [], []>} : vector<16x8xbf16>, vector<8x32xbf16>, vector<16x32xf32> -> vector<16x32xf32>
    %62 = arith.addf %36, %61 : vector<16x32xf32>
    %63 = vector.extract_strided_slice %35 {offsets = [0, 8], sizes = [16, 8], strides = [1, 1]} : vector<16x96xf32> to vector<16x8xf32>
    %64 = arith.truncf %63 : vector<16x8xf32> to vector<16x8xbf16>
    %65 = vector.extract_strided_slice %35 {offsets = [0, 40], sizes = [16, 8], strides = [1, 1]} : vector<16x96xf32> to vector<16x8xf32>
    %66 = arith.truncf %65 : vector<16x8xf32> to vector<16x8xbf16>
    %67 = vector.extract_strided_slice %35 {offsets = [0, 72], sizes = [16, 8], strides = [1, 1]} : vector<16x96xf32> to vector<16x8xf32>
    %68 = arith.truncf %67 : vector<16x8xf32> to vector<16x8xbf16>
    %cst_25 = arith.constant dense<0.000000e+00> : vector<16x16xf32>
    %69 = tpu.matmul %64, %66, %cst_25 {dimension_numbers = #tpu.dot_dimension_numbers<[1], [1], [0], [0], [0, 0, 1, 0], [], []>} : vector<16x8xbf16>, vector<16x8xbf16>, vector<16x16xf32> -> vector<16x16xf32>
    %cst_26 = arith.constant 0.353553385 : f32
    %70 = vector.broadcast %cst_26 : f32 to vector<16x16xf32>
    %71 = arith.mulf %69, %70 : vector<16x16xf32>
    %72 = arith.addf %71, %2 : vector<16x16xf32>
    %cst_27 = arith.constant dense<0xFF800000> : vector<16xf32>
    %73 = vector.multi_reduction <maximumf>, %72, %cst_27 [1] : vector<16x16xf32> to vector<16xf32>
    %74 = vector.shape_cast %73 : vector<16xf32> to vector<16x1xf32>
    %75 = vector.broadcast %74 : vector<16x1xf32> to vector<16x16xf32>
    %76 = arith.subf %72, %75 : vector<16x16xf32>
    %77 = math.exp %76 : vector<16x16xf32>
    %cst_28 = arith.constant dense<0.000000e+00> : vector<16xf32>
    %78 = vector.multi_reduction <add>, %77, %cst_28 [1] : vector<16x16xf32> to vector<16xf32>
    %79 = vector.shape_cast %78 : vector<16xf32> to vector<16x1xf32>
    %80 = tpu.reciprocal %79 {approx = true} : vector<16x1xf32> -> vector<16x1xf32>
    %81 = vector.broadcast %80 : vector<16x1xf32> to vector<16x16xf32>
    %82 = arith.mulf %77, %81 : vector<16x16xf32>
    %83 = arith.truncf %82 : vector<16x16xf32> to vector<16x16xbf16>
    %cst_29 = arith.constant dense<0.000000e+00> : vector<16x8xf32>
    %84 = tpu.matmul %83, %68, %cst_29 {dimension_numbers = #tpu.dot_dimension_numbers<[1], [0], [0], [1], [0, 0, 1, 1], [], []>} : vector<16x16xbf16>, vector<16x8xbf16>, vector<16x8xf32> -> vector<16x8xf32>
    %85 = arith.truncf %84 : vector<16x8xf32> to vector<16x8xbf16>
    %c8 = arith.constant 8 : index
    %c0_30 = arith.constant 0 : index
    %86 = vector.load %arg4[%c8, %c0_30] : memref<32x32xbf16, #tpu.memory_space<vmem>>, vector<8x32xbf16>
    %cst_31 = arith.constant dense<0.000000e+00> : vector<16x32xf32>
    %87 = tpu.matmul %85, %86, %cst_31 {dimension_numbers = #tpu.dot_dimension_numbers<[1], [0], [0], [1], [0, 0, 1, 1], [], []>} : vector<16x8xbf16>, vector<8x32xbf16>, vector<16x32xf32> -> vector<16x32xf32>
    %88 = arith.addf %62, %87 : vector<16x32xf32>
    %89 = vector.extract_strided_slice %35 {offsets = [0, 16], sizes = [16, 8], strides = [1, 1]} : vector<16x96xf32> to vector<16x8xf32>
    %90 = arith.truncf %89 : vector<16x8xf32> to vector<16x8xbf16>
    %91 = vector.extract_strided_slice %35 {offsets = [0, 48], sizes = [16, 8], strides = [1, 1]} : vector<16x96xf32> to vector<16x8xf32>
    %92 = arith.truncf %91 : vector<16x8xf32> to vector<16x8xbf16>
    %93 = vector.extract_strided_slice %35 {offsets = [0, 80], sizes = [16, 8], strides = [1, 1]} : vector<16x96xf32> to vector<16x8xf32>
    %94 = arith.truncf %93 : vector<16x8xf32> to vector<16x8xbf16>
    %cst_32 = arith.constant dense<0.000000e+00> : vector<16x16xf32>
    %95 = tpu.matmul %90, %92, %cst_32 {dimension_numbers = #tpu.dot_dimension_numbers<[1], [1], [0], [0], [0, 0, 1, 0], [], []>} : vector<16x8xbf16>, vector<16x8xbf16>, vector<16x16xf32> -> vector<16x16xf32>
    %cst_33 = arith.constant 0.353553385 : f32
    %96 = vector.broadcast %cst_33 : f32 to vector<16x16xf32>
    %97 = arith.mulf %95, %96 : vector<16x16xf32>
    %98 = arith.addf %97, %2 : vector<16x16xf32>
    %cst_34 = arith.constant dense<0xFF800000> : vector<16xf32>
    %99 = vector.multi_reduction <maximumf>, %98, %cst_34 [1] : vector<16x16xf32> to vector<16xf32>
    %100 = vector.shape_cast %99 : vector<16xf32> to vector<16x1xf32>
    %101 = vector.broadcast %100 : vector<16x1xf32> to vector<16x16xf32>
    %102 = arith.subf %98, %101 : vector<16x16xf32>
    %103 = math.exp %102 : vector<16x16xf32>
    %cst_35 = arith.constant dense<0.000000e+00> : vector<16xf32>
    %104 = vector.multi_reduction <add>, %103, %cst_35 [1] : vector<16x16xf32> to vector<16xf32>
    %105 = vector.shape_cast %104 : vector<16xf32> to vector<16x1xf32>
    %106 = tpu.reciprocal %105 {approx = true} : vector<16x1xf32> -> vector<16x1xf32>
    %107 = vector.broadcast %106 : vector<16x1xf32> to vector<16x16xf32>
    %108 = arith.mulf %103, %107 : vector<16x16xf32>
    %109 = arith.truncf %108 : vector<16x16xf32> to vector<16x16xbf16>
    %cst_36 = arith.constant dense<0.000000e+00> : vector<16x8xf32>
    %110 = tpu.matmul %109, %94, %cst_36 {dimension_numbers = #tpu.dot_dimension_numbers<[1], [0], [0], [1], [0, 0, 1, 1], [], []>} : vector<16x16xbf16>, vector<16x8xbf16>, vector<16x8xf32> -> vector<16x8xf32>
    %111 = arith.truncf %110 : vector<16x8xf32> to vector<16x8xbf16>
    %c16 = arith.constant 16 : index
    %c0_37 = arith.constant 0 : index
    %112 = vector.load %arg4[%c16, %c0_37] : memref<32x32xbf16, #tpu.memory_space<vmem>>, vector<8x32xbf16>
    %cst_38 = arith.constant dense<0.000000e+00> : vector<16x32xf32>
    %113 = tpu.matmul %111, %112, %cst_38 {dimension_numbers = #tpu.dot_dimension_numbers<[1], [0], [0], [1], [0, 0, 1, 1], [], []>} : vector<16x8xbf16>, vector<8x32xbf16>, vector<16x32xf32> -> vector<16x32xf32>
    %114 = arith.addf %88, %113 : vector<16x32xf32>
    %115 = vector.extract_strided_slice %35 {offsets = [0, 24], sizes = [16, 8], strides = [1, 1]} : vector<16x96xf32> to vector<16x8xf32>
    %116 = arith.truncf %115 : vector<16x8xf32> to vector<16x8xbf16>
    %117 = vector.extract_strided_slice %35 {offsets = [0, 56], sizes = [16, 8], strides = [1, 1]} : vector<16x96xf32> to vector<16x8xf32>
    %118 = arith.truncf %117 : vector<16x8xf32> to vector<16x8xbf16>
    %119 = vector.extract_strided_slice %35 {offsets = [0, 88], sizes = [16, 8], strides = [1, 1]} : vector<16x96xf32> to vector<16x8xf32>
    %120 = arith.truncf %119 : vector<16x8xf32> to vector<16x8xbf16>
    %cst_39 = arith.constant dense<0.000000e+00> : vector<16x16xf32>
    %121 = tpu.matmul %116, %118, %cst_39 {dimension_numbers = #tpu.dot_dimension_numbers<[1], [1], [0], [0], [0, 0, 1, 0], [], []>} : vector<16x8xbf16>, vector<16x8xbf16>, vector<16x16xf32> -> vector<16x16xf32>
    %cst_40 = arith.constant 0.353553385 : f32
    %122 = vector.broadcast %cst_40 : f32 to vector<16x16xf32>
    %123 = arith.mulf %121, %122 : vector<16x16xf32>
    %124 = arith.addf %123, %2 : vector<16x16xf32>
    %cst_41 = arith.constant dense<0xFF800000> : vector<16xf32>
    %125 = vector.multi_reduction <maximumf>, %124, %cst_41 [1] : vector<16x16xf32> to vector<16xf32>
    %126 = vector.shape_cast %125 : vector<16xf32> to vector<16x1xf32>
    %127 = vector.broadcast %126 : vector<16x1xf32> to vector<16x16xf32>
    %128 = arith.subf %124, %127 : vector<16x16xf32>
    %129 = math.exp %128 : vector<16x16xf32>
    %cst_42 = arith.constant dense<0.000000e+00> : vector<16xf32>
    %130 = vector.multi_reduction <add>, %129, %cst_42 [1] : vector<16x16xf32> to vector<16xf32>
    %131 = vector.shape_cast %130 : vector<16xf32> to vector<16x1xf32>
    %132 = tpu.reciprocal %131 {approx = true} : vector<16x1xf32> -> vector<16x1xf32>
    %133 = vector.broadcast %132 : vector<16x1xf32> to vector<16x16xf32>
    %134 = arith.mulf %129, %133 : vector<16x16xf32>
    %135 = arith.truncf %134 : vector<16x16xf32> to vector<16x16xbf16>
    %cst_43 = arith.constant dense<0.000000e+00> : vector<16x8xf32>
    %136 = tpu.matmul %135, %120, %cst_43 {dimension_numbers = #tpu.dot_dimension_numbers<[1], [0], [0], [1], [0, 0, 1, 1], [], []>} : vector<16x16xbf16>, vector<16x8xbf16>, vector<16x8xf32> -> vector<16x8xf32>
    %137 = arith.truncf %136 : vector<16x8xf32> to vector<16x8xbf16>
    %c24 = arith.constant 24 : index
    %c0_44 = arith.constant 0 : index
    %138 = vector.load %arg4[%c24, %c0_44] : memref<32x32xbf16, #tpu.memory_space<vmem>>, vector<8x32xbf16>
    %cst_45 = arith.constant dense<0.000000e+00> : vector<16x32xf32>
    %139 = tpu.matmul %137, %138, %cst_45 {dimension_numbers = #tpu.dot_dimension_numbers<[1], [0], [0], [1], [0, 0, 1, 1], [], []>} : vector<16x8xbf16>, vector<8x32xbf16>, vector<16x32xf32> -> vector<16x32xf32>
    %140 = arith.addf %114, %139 : vector<16x32xf32>
    %141 = arith.addf %0, %140 : vector<16x32xf32>
    %142 = vector.broadcast %8 : vector<1x32xf32> to vector<16x32xf32>
    %143 = arith.addf %141, %142 : vector<16x32xf32>
    %144 = vector.broadcast %1 : vector<16x1xf32> to vector<16x32xf32>
    %145 = arith.mulf %143, %144 : vector<16x32xf32>
    %cst_46 = arith.constant dense<0.000000e+00> : vector<16xf32>
    %146 = vector.multi_reduction <add>, %145, %cst_46 [1] : vector<16x32xf32> to vector<16xf32>
    %147 = vector.shape_cast %146 : vector<16xf32> to vector<16x1xf32>
    %cst_47 = arith.constant 3.200000e+01 : f32
    %148 = vector.broadcast %cst_47 : f32 to vector<16x1xf32>
    %149 = arith.divf %147, %148 : vector<16x1xf32>
    %150 = vector.broadcast %149 : vector<16x1xf32> to vector<16x32xf32>
    %151 = arith.subf %145, %150 : vector<16x32xf32>
    %152 = arith.mulf %151, %151 : vector<16x32xf32>
    %cst_48 = arith.constant dense<0.000000e+00> : vector<16xf32>
    %153 = vector.multi_reduction <add>, %152, %cst_48 [1] : vector<16x32xf32> to vector<16xf32>
    %154 = vector.shape_cast %153 : vector<16xf32> to vector<16x1xf32>
    %cst_49 = arith.constant 3.200000e+01 : f32
    %155 = vector.broadcast %cst_49 : f32 to vector<16x1xf32>
    %156 = arith.divf %154, %155 : vector<16x1xf32>
    %cst_50 = arith.constant 9.99999974E-6 : f32
    %157 = vector.broadcast %cst_50 : f32 to vector<16x1xf32>
    %158 = arith.addf %156, %157 : vector<16x1xf32>
    %159 = math.rsqrt %158 : vector<16x1xf32>
    %160 = vector.broadcast %159 : vector<16x1xf32> to vector<16x32xf32>
    %161 = arith.mulf %151, %160 : vector<16x32xf32>
    %162 = vector.broadcast %6 : vector<1x32xf32> to vector<16x32xf32>
    %163 = arith.mulf %161, %162 : vector<16x32xf32>
    %164 = vector.broadcast %7 : vector<1x32xf32> to vector<16x32xf32>
    %165 = arith.addf %163, %164 : vector<16x32xf32>
    %166 = arith.truncf %165 : vector<16x32xf32> to vector<16x32xbf16>
    %c0_51 = arith.constant 0 : index
    %c0_52 = arith.constant 0 : index
    %167 = vector.load %arg5[%c0_51, %c0_52] : memref<32x64xbf16, #tpu.memory_space<vmem>>, vector<32x64xbf16>
    %cst_53 = arith.constant dense<0.000000e+00> : vector<16x64xf32>
    %168 = tpu.matmul %166, %167, %cst_53 {dimension_numbers = #tpu.dot_dimension_numbers<[1], [0], [0], [1], [0, 0, 1, 1], [], []>} : vector<16x32xbf16>, vector<32x64xbf16>, vector<16x64xf32> -> vector<16x64xf32>
    %c0_54 = arith.constant 0 : index
    %c0_55 = arith.constant 0 : index
    %169 = vector.load %arg9[%c0_54, %c0_55] : memref<1x64xf32, #tpu.memory_space<vmem>>, vector<1x64xf32>
    %170 = vector.broadcast %169 : vector<1x64xf32> to vector<16x64xf32>
    %171 = arith.addf %168, %170 : vector<16x64xf32>
    %cst_56 = arith.constant 0.707106769 : f32
    %172 = vector.broadcast %cst_56 : f32 to vector<16x64xf32>
    %173 = arith.mulf %171, %172 : vector<16x64xf32>
    %174 = math.absf %173 : vector<16x64xf32>
    %cst_57 = arith.constant 0.327591091 : f32
    %175 = vector.broadcast %cst_57 : f32 to vector<16x64xf32>
    %176 = arith.mulf %175, %174 : vector<16x64xf32>
    %cst_58 = arith.constant 1.000000e+00 : f32
    %177 = vector.broadcast %cst_58 : f32 to vector<16x64xf32>
    %178 = arith.addf %177, %176 : vector<16x64xf32>
    %cst_59 = arith.constant 1.000000e+00 : f32
    %179 = vector.broadcast %cst_59 : f32 to vector<16x64xf32>
    %180 = arith.divf %179, %178 : vector<16x64xf32>
    %cst_60 = arith.constant 1.06140542 : f32
    %181 = vector.broadcast %cst_60 : f32 to vector<16x64xf32>
    %182 = arith.mulf %181, %180 : vector<16x64xf32>
    %cst_61 = arith.constant 1.45315206 : f32
    %183 = vector.broadcast %cst_61 : f32 to vector<16x64xf32>
    %184 = arith.subf %182, %183 : vector<16x64xf32>
    %185 = arith.mulf %184, %180 : vector<16x64xf32>
    %cst_62 = arith.constant 1.42141378 : f32
    %186 = vector.broadcast %cst_62 : f32 to vector<16x64xf32>
    %187 = arith.addf %185, %186 : vector<16x64xf32>
    %188 = arith.mulf %187, %180 : vector<16x64xf32>
    %cst_63 = arith.constant 0.284496725 : f32
    %189 = vector.broadcast %cst_63 : f32 to vector<16x64xf32>
    %190 = arith.subf %188, %189 : vector<16x64xf32>
    %191 = arith.mulf %190, %180 : vector<16x64xf32>
    %cst_64 = arith.constant 0.254829586 : f32
    %192 = vector.broadcast %cst_64 : f32 to vector<16x64xf32>
    %193 = arith.addf %191, %192 : vector<16x64xf32>
    %194 = arith.mulf %193, %180 : vector<16x64xf32>
    %cst_65 = arith.constant 0.000000e+00 : f32
    %195 = vector.broadcast %cst_65 : f32 to vector<16x64xf32>
    %196 = arith.subf %195, %174 : vector<16x64xf32>
    %197 = arith.mulf %196, %174 : vector<16x64xf32>
    %198 = math.exp %197 : vector<16x64xf32>
    %199 = arith.mulf %194, %198 : vector<16x64xf32>
    %cst_66 = arith.constant 1.000000e+00 : f32
    %200 = vector.broadcast %cst_66 : f32 to vector<16x64xf32>
    %201 = arith.subf %200, %199 : vector<16x64xf32>
    %cst_67 = arith.constant 0.000000e+00 : f32
    %202 = vector.broadcast %cst_67 : f32 to vector<16x64xf32>
    %203 = arith.cmpf oge, %173, %202 : vector<16x64xf32>
    %cst_68 = arith.constant 0.000000e+00 : f32
    %204 = vector.broadcast %cst_68 : f32 to vector<16x64xf32>
    %205 = arith.subf %204, %201 : vector<16x64xf32>
    %206 = arith.select %203, %201, %205 : vector<16x64xi1>, vector<16x64xf32>
    %cst_69 = arith.constant 5.000000e-01 : f32
    %207 = vector.broadcast %cst_69 : f32 to vector<16x64xf32>
    %208 = arith.mulf %207, %171 : vector<16x64xf32>
    %cst_70 = arith.constant 1.000000e+00 : f32
    %209 = vector.broadcast %cst_70 : f32 to vector<16x64xf32>
    %210 = arith.addf %209, %206 : vector<16x64xf32>
    %211 = arith.mulf %208, %210 : vector<16x64xf32>
    %212 = arith.truncf %211 : vector<16x64xf32> to vector<16x64xbf16>
    %c0_71 = arith.constant 0 : index
    %c0_72 = arith.constant 0 : index
    %213 = vector.load %arg6[%c0_71, %c0_72] : memref<64x32xbf16, #tpu.memory_space<vmem>>, vector<64x32xbf16>
    %cst_73 = arith.constant dense<0.000000e+00> : vector<16x32xf32>
    %214 = tpu.matmul %212, %213, %cst_73 {dimension_numbers = #tpu.dot_dimension_numbers<[1], [0], [0], [1], [0, 0, 1, 1], [], []>} : vector<16x64xbf16>, vector<64x32xbf16>, vector<16x32xf32> -> vector<16x32xf32>
    %215 = vector.broadcast %9 : vector<1x32xf32> to vector<16x32xf32>
    %216 = arith.addf %214, %215 : vector<16x32xf32>
    %217 = arith.addf %145, %216 : vector<16x32xf32>
    %218 = vector.broadcast %1 : vector<16x1xf32> to vector<16x32xf32>
    %219 = arith.mulf %217, %218 : vector<16x32xf32>
    %c0_74 = arith.constant 0 : index
    %c0_75 = arith.constant 0 : index
    %220 = vector.load %arg10[%c0_74, %c0_75] : memref<16x32xf32, #tpu.memory_space<vmem>>, vector<16x32xf32>
    tpu.vector_store %arg10[%c0_74, %c0_75], %219 {strides = array<i32>} : memref<16x32xf32, #tpu.memory_space<vmem>>, vector<16x32xf32>,
    return
  }
}

</mosaic_0001>

<llo_original>
// kernel: mul.22
$region0: #{mul.22}
  %s0 = inlined_call_operand.vmem [shape: f32[2,8], index: 0, kind: input, shape index: {}]
  %s1 = inlined_call_operand.vmem [shape: f32[16], index: 1, kind: output, shape index: {}]
  $region1: #{mul.22} parent=0
    #allocation0 [shape = 'u8[4096]{0}', space=vmem, size = 0x1000, scoped, tag = 'scoped mem for output reshape']
    #allocation1 [shape = 'u8[4096]{0}', space=vmem, size = 0x1000, scoped, tag = 'scoped mem for input reshape']
    %s3 = sshllo.u32 0, 2
    %v4 = vld [vmem:[%s0] sm:%s3]
    %5 = vst [vmem:[#allocation1] sm:%s3] %v4
    %v6 = vld [vmem:[#allocation1] sm:$0x1]
    %vm7 = vcmask 64512
    %8 = vst.msk [vmem:[#allocation0] sm:$0x1] %vm7, %v6
    %s9 = scalar_lea.vmem [#allocation1], 1
    %v10 = vld [vmem:[%s9] sm:$0x1]
    %11 = vrot.lane.b32.xlu0 %v10, 8
    %v12 = vpop.permute.xlu0 %11
    %vm13 = vcmask 130112
    %14 = vst.msk [vmem:[#allocation0] sm:$0x1] %vm13, %v12
    %s16 = sshllo.u32 0, 1
    %v18 = vld [vmem:[#allocation0] sm:%s16]
    %s19 = sshllo.u32 0, 1
    %20 = vst [vmem:[%s1] sm:%s19] %v18

// kernel: transformer_block.1
$region0: #{transformer_block.1}
  #allocation0 [shape = 'u32[]', space=smem, size = 0x4, offset = 0x4, fixed_abs, tag = 'smem constant byte address 0x4 - core index']
  #allocation1 [shape = 'u32[144,128]{1,0:T(1,128)}', space=vmem, size = 0x12000, scoped, tag = 'internal scratch']
  %s0 = inlined_call_operand.vmem [shape: f32[16,32], index: 0, kind: input, shape index: {}]
  %s1 = inlined_call_operand.vmem [shape: f32[16,16], index: 1, kind: input, shape index: {}]
  %s2 = inlined_call_operand.vmem [shape: f32[16,1], index: 2, kind: input, shape index: {}]
  %s3 = inlined_call_operand.vmem [shape: bf16[32,96], index: 3, kind: input, shape index: {}]
  %s4 = inlined_call_operand.vmem [shape: bf16[32,32], index: 4, kind: input, shape index: {}]
  %s5 = inlined_call_operand.vmem [shape: bf16[32,64], index: 5, kind: input, shape index: {}]
  %s6 = inlined_call_operand.vmem [shape: bf16[64,32], index: 6, kind: input, shape index: {}]
  %s7 = inlined_call_operand.vmem [shape: f32[6,32], index: 7, kind: input, shape index: {}]
  %s8 = inlined_call_operand.vmem [shape: f32[1,96], index: 8, kind: input, shape index: {}]
  %s9 = inlined_call_operand.vmem [shape: f32[1,64], index: 9, kind: input, shape index: {}]
  %s10 = inlined_call_operand.hbm [shape: f32[16,32], index: 10, kind: output, shape index: {}]
  %s11 = sld [smem:[#allocation0]]
  $region50: #{transformer_block.1} parent=0
    _
  %s13 = ssub.s32 1, %s11
  %s14 = scalar_select 0, %s13, %s11
  $region1: #{transformer_block.1} parent=0
    #allocation2 [shape = 'u8[8192]{0}', space=vmem, size = 0x2000, scoped, tag = 'output window, operand 0, single buffered']
    #allocation3 [shape = 's32[1]{0}', space=sflag, size = 0x4, scoped, tag = 'scoped memory for transformer_block.1']
    %15 = vsyncpa [#allocation3], 0
    // Predicated region
    $region2: #{transformer_block.1} parent=1 // pred_check
      _
    $region3: #{transformer_block.1} parent=1 // pred_check_branch
      %17 = sbr.rel (0) target = $region5
    $region4: #{transformer_block.1} parent=1 // pred_region
      _
    $region5: #{transformer_block.1} parent=1 // pred_fallthru
      _
    // Predicated region
    $region6: #{transformer_block.1} parent=1 // pred_check
      _
    $region7: #{transformer_block.1} parent=1 // pred_check_branch
      %19 = sbr.rel (0) target = $region9
    $region8: #{transformer_block.1} parent=1 // pred_region
      _
    $region9: #{transformer_block.1} parent=1 // pred_fallthru
      _
    // Predicated region
    $region10: #{transformer_block.1} parent=1 // pred_check
      _
    $region11: #{transformer_block.1} parent=1 // pred_check_branch
      %21 = sbr.rel (0) target = $region13
    $region12: #{transformer_block.1} parent=1 // pred_region
      _
    $region13: #{transformer_block.1} parent=1 // pred_fallthru
      _
    // Predicated region
    $region14: #{transformer_block.1} parent=1 // pred_check
      _
    $region15: #{transformer_block.1} parent=1 // pred_check_branch
      %23 = sbr.rel (0) target = $region17
    $region16: #{transformer_block.1} parent=1 // pred_region
      _
    $region17: #{transformer_block.1} parent=1 // pred_fallthru
      _
    // Predicated region
    $region18: #{transformer_block.1} parent=1 // pred_check
      _
    $region19: #{transformer_block.1} parent=1 // pred_check_branch
      %25 = sbr.rel (0) target = $region21
    $region20: #{transformer_block.1} parent=1 // pred_region
      _
    $region21: #{transformer_block.1} parent=1 // pred_fallthru
      _
    // Predicated region
    $region22: #{transformer_block.1} parent=1 // pred_check
      _
    $region23: #{transformer_block.1} parent=1 // pred_check_branch
      %27 = sbr.rel (0) target = $region25
    $region24: #{transformer_block.1} parent=1 // pred_region
      _
    $region25: #{transformer_block.1} parent=1 // pred_fallthru
      _
    // Predicated region
    $region26: #{transformer_block.1} parent=1 // pred_check
      _
    $region27: #{transformer_block.1} parent=1 // pred_check_branch
      %29 = sbr.rel (0) target = $region29
    $region28: #{transformer_block.1} parent=1 // pred_region
      _
    $region29: #{transformer_block.1} parent=1 // pred_fallthru
      _
    // Predicated region
    $region30: #{transformer_block.1} parent=1 // pred_check
      _
    $region31: #{transformer_block.1} parent=1 // pred_check_branch
      %31 = sbr.rel (0) target = $region33
    $region32: #{transformer_block.1} parent=1 // pred_region
      _
    $region33: #{transformer_block.1} parent=1 // pred_fallthru
      _
    // Predicated region
    $region34: #{transformer_block.1} parent=1 // pred_check
      _
    $region35: #{transformer_block.1} parent=1 // pred_check_branch
      %33 = sbr.rel (0) target = $region37
    $region36: #{transformer_block.1} parent=1 // pred_region
      _
    $region37: #{transformer_block.1} parent=1 // pred_fallthru
      _
    // Predicated region
    $region38: #{transformer_block.1} parent=1 // pred_check
      _
    $region39: #{transformer_block.1} parent=1 // pred_check_branch
      %35 = sbr.rel (0) target = $region41
    $region40: #{transformer_block.1} parent=1 // pred_region
      _
    $region41: #{transformer_block.1} parent=1 // pred_fallthru
      _
    %v37 = vld [vmem:[%s0] sm:$0xff]
    %v38 = vld [vmem:[%s0 + $0x8] sm:$0xff]
    %v39 = vld [vmem:[%s2] sm:$0xff]
    %v40 = vld [vmem:[%s2 + $0x8] sm:$0xff]
    %v41 = vld [vmem:[%s1] sm:$0xff]
    %v42 = vld [vmem:[%s1 + $0x8] sm:$0xff]
    %v43 = vld [vmem:[%s7] sm:$0x3f]
    %vm44 = vcmask 261120
    %v45 = vsel %vm44, %v37, 0.0
    %46 = vadd.xlane.f32.xlu0 %v45
    %v47 = vpop.xlane.xlu0 %46
    %v48 = vsel %vm44, %v38, 0.0
    %49 = vadd.xlane.f32.xlu0 %v48
    %v50 = vpop.xlane.xlu0 %49
    %v51 = vrcp.pop 32.0
    %v52 = vmul.f32 %v47, %v51
    %v53 = vmul.f32 %v50, %v51
    %v54 = vsub.f32 %v37, %v52
    %v55 = vsub.f32 %v38, %v53
    %v56 = vmul.f32 %v54, %v54
    %v57 = vmul.f32 %v55, %v55
    %v58 = vsel %vm44, %v56, 0.0
    %59 = vadd.xlane.f32.xlu0 %v58
    %v60 = vpop.xlane.xlu0 %59
    %v61 = vsel %vm44, %v57, 0.0
    %62 = vadd.xlane.f32.xlu0 %v61
    %v63 = vpop.xlane.xlu0 %62
    %v64 = vmul.f32 %v60, %v51
    %v65 = vmul.f32 %v63, %v51
    %v66 = vadd.f32 %v64, 1e-05
    %v67 = vadd.f32 %v65, 1e-05
    %v68 = vrsqrt.pop %v66
    %v69 = vrsqrt.pop %v67
    %v70 = vmul.f32 %v54, %v68
    %v71 = vmul.f32 %v55, %v69
    %v72 = vlaneseq
    %v73 = vshrl.u32 %v72, 7
    %v74 = vsub.s32 0, %v73
    %v75 = vrot.slane %v43, %v74
    %v76 = vmul.f32 %v70, %v75
    %v77 = vmul.f32 %v71, %v75
    %v78 = vlaneseq
    %v79 = vshrl.u32 %v78, 7
    %v80 = vsub.s32 1, %v79
    %v81 = vrot.slane %v43, %v80
    %v82 = vadd.f32 %v76, %v81
    %v83 = vadd.f32 %v77, %v81
    %v84 = vpack.c.bf16 %v83, %v82
    %v85 = vld [vmem:[%s3] sm:$0xf]
    %v86 = vld [vmem:[%s3 + $0x4] sm:$0xf]
    %v87 = vld [vmem:[%s3 + $0x8] sm:$0xf]
    %v88 = vld [vmem:[%s3 + $0xc] sm:$0xf]
    %v89 = vld [vmem:[%s8] sm:$0x1]
    %v91 = vlaneseq
    %v92 = vshrl.u32 %v91, 7
    %v93 = vsub.s32 0, %v92
    %v94 = vrot.slane %v89, %v93
    %v100 = vunpack.c.l.b16 %v85
    %v101 = vunpack.c.l.b16 %v86
    %v102 = vunpack.c.l.b16 %v87
    %v103 = vunpack.c.l.b16 %v88
    %v104 = vpack.c.b16 %v101, %v100
    %v105 = vpack.c.b16 %v103, %v102
    %v109 = vsel %vm44, %v84, 0
    %111 = vmatprep.subr.bf16.mxu0 0
    %112 = vmatpush1.bf16.msra.mxu0 %v104
    %113 = vmatprep.subr.bf16.mxu0 0
    %114 = vmatpush1.bf16.msra.mxu0 %v105
    %115 = vmatprep.subr.bf16.mxu0 0
    %116 = vmatpush1.bf16.msra.mxu0 0
    %117 = vmatprep.subr.bf16.mxu0 0
    %118 = vmatpush1.bf16.msra.mxu0 0
    %119 = vmatprep.subr.bf16.mxu0 0
    %120 = vmatpush1.bf16.msra.mxu0 0
    %121 = vmatprep.subr.bf16.mxu0 0
    %122 = vmatpush1.bf16.msra.mxu0 0
    %123 = vmatprep.subr.bf16.mxu0 0
    %124 = vmatpush1.bf16.msra.mxu0 0
    %125 = vmatprep.subr.bf16.mxu0 0
    %126 = vmatpush1.bf16.msra.mxu0 0
    %127 = vmatprep.subr.bf16.mxu0 0
    %128 = vmatpush1.bf16.msra.mxu0 0
    %129 = vmatprep.subr.bf16.mxu0 0
    %130 = vmatpush1.bf16.msra.mxu0 0
    %131 = vmatprep.subr.bf16.mxu0 0
    %132 = vmatpush1.bf16.msra.mxu0 0
    %133 = vmatprep.subr.bf16.mxu0 0
    %134 = vmatpush1.bf16.msra.mxu0 0
    %135 = vmatprep.subr.bf16.mxu0 0
    %136 = vmatpush1.bf16.msra.mxu0 0
    %137 = vmatprep.subr.bf16.mxu0 0
    %138 = vmatpush1.bf16.msra.mxu0 0
    %139 = vmatprep.subr.bf16.mxu0 0
    %140 = vmatpush1.bf16.msra.mxu0 0
    %141 = vmatprep.subr.bf16.mxu0 0
    %142 = vmatpush1.bf16.msra.mxu0 0
    %143 = vmatprep.mubr.bf16.mxu0 0
    %144 = vmatmul.mubr.bf16.gmra.mrb[0].mxu0 %v109
    %v145 = vpop.f32.mrb[0].mxu0
    %v146 = vadd.f32 %v94, %v145
    %v147 = vpop.f32.mrb[0].mxu0
    %v148 = vpop.f32.mrb[0].mxu0
    %v149 = vadd.f32 %v94, %v148
    %v150 = vpop.f32.mrb[0].mxu0
    %151 = vdwg.mxu0
    %v152 = vpack.c.bf16 %v149, %v146
    %154 = vrot.lane.b32.xlu0 %v152, 96
    %v155 = vpop.permute.xlu0 %154
    %vm156 = vcmask 64512
    %v158 = vsel %vm156, %v152, 0
    %v161 = vsel %vm156, %v155, 0
    %163 = vmatprep.subr.bf16.mxu0 0
    %164 = vmatpush1.bf16.xpose.msra.mxu0 %v161
    %165 = vmatprep.subr.bf16.mxu0 0
    %166 = vmatpush1.bf16.xpose.msra.mxu0 0
    %167 = vmatprep.subr.bf16.mxu0 0
    %168 = vmatpush1.bf16.xpose.msra.mxu0 0
    %169 = vmatprep.subr.bf16.mxu0 0
    %170 = vmatpush1.bf16.xpose.msra.mxu0 0
    %171 = vmatprep.subr.bf16.mxu0 0
    %172 = vmatpush1.bf16.xpose.msra.mxu0 0
    %173 = vmatprep.subr.bf16.mxu0 0
    %174 = vmatpush1.bf16.xpose.msra.mxu0 0
    %175 = vmatprep.subr.bf16.mxu0 0
    %176 = vmatpush1.bf16.xpose.msra.mxu0 0
    %177 = vmatprep.subr.bf16.mxu0 0
    %178 = vmatpush1.bf16.xpose.msra.mxu0 0
    %179 = vmatprep.subr.bf16.mxu0 0
    %180 = vmatpush1.bf16.xpose.msra.mxu0 0
    %181 = vmatprep.subr.bf16.mxu0 0
    %182 = vmatpush1.bf16.xpose.msra.mxu0 0
    %183 = vmatprep.subr.bf16.mxu0 0
    %184 = vmatpush1.bf16.xpose.msra.mxu0 0
    %185 = vmatprep.subr.bf16.mxu0 0
    %186 = vmatpush1.bf16.xpose.msra.mxu0 0
    %187 = vmatprep.subr.bf16.mxu0 0
    %188 = vmatpush1.bf16.xpose.msra.mxu0 0
    %189 = vmatprep.subr.bf16.mxu0 0
    %190 = vmatpush1.bf16.xpose.msra.mxu0 0
    %191 = vmatprep.subr.bf16.mxu0 0
    %192 = vmatpush1.bf16.xpose.msra.mxu0 0
    %193 = vmatprep.subr.bf16.mxu0 0
    %194 = vmatpush1.bf16.xpose.msra.mxu0 0
    %195 = vmatprep.mubr.bf16.mxu0 0
    %196 = vmatmul.mubr.bf16.gmra.mrb[0].mxu0 %v158
    %v197 = vpop.f32.mrb[0].mxu0
    %v198 = vadd.f32 0.0, %v197
    %v199 = vpop.f32.mrb[0].mxu0
    %v200 = vpop.f32.mrb[0].mxu0
    %v201 = vadd.f32 0.0, %v200
    %v202 = vpop.f32.mrb[0].mxu0
    %203 = vdwg.mxu0
    %v204 = vmul.f32 %v198, 0.35355338
    %v205 = vmul.f32 %v201, 0.35355338
    %v206 = vadd.f32 %v204, %v41
    %v207 = vadd.f32 %v205, %v42
    %vm208 = vcmask 130048
    %v209 = vsel %vm208, %v206, -inf
    %210 = vmax.xlane.f32.xlu0 %v209
    %v211 = vpop.xlane.xlu0 %210
    %v212 = vsel %vm208, %v207, -inf
    %213 = vmax.xlane.f32.xlu0 %v212
    %v214 = vpop.xlane.xlu0 %213
    %v215 = vsub.f32 %v206, %v211
    %v216 = vsub.f32 %v207, %v214
    %v217 = vmul.f32 %v215, 1.442695
    %v218 = vpow.pop %v217
    %v219 = vmul.f32 %v216, 1.442695
    %v220 = vpow.pop %v219
    %v221 = vsel %vm208, %v218, 0.0
    %222 = vadd.xlane.f32.xlu0 %v221
    %v223 = vpop.xlane.xlu0 %222
    %v224 = vsel %vm208, %v220, 0.0
    %225 = vadd.xlane.f32.xlu0 %v224
    %v226 = vpop.xlane.xlu0 %225
    %v227 = vrcp.pop %v223
    %v228 = vrcp.pop %v226
    %v229 = vmul.f32 %v218, %v227
    %v230 = vmul.f32 %v220, %v228
    %v231 = vpack.c.bf16 %v230, %v229
    %232 = vrot.lane.b32.xlu0 %v152, 64
    %v233 = vpop.permute.xlu0 %232
    %v236 = vsel %vm208, %v231, 0
    %238 = vmatprep.subr.bf16.mxu0 0
    %239 = vmatpush1.bf16.msra.mxu0 %v233
    %240 = vmatprep.subr.bf16.mxu0 0
    %241 = vmatpush1.bf16.msra.mxu0 0
    %242 = vmatprep.subr.bf16.mxu0 0
    %243 = vmatpush1.bf16.msra.mxu0 0
    %244 = vmatprep.subr.bf16.mxu0 0
    %245 = vmatpush1.bf16.msra.mxu0 0
    %246 = vmatprep.subr.bf16.mxu0 0
    %247 = vmatpush1.bf16.msra.mxu0 0
    %248 = vmatprep.subr.bf16.mxu0 0
    %249 = vmatpush1.bf16.msra.mxu0 0
    %250 = vmatprep.subr.bf16.mxu0 0
    %251 = vmatpush1.bf16.msra.mxu0 0
    %252 = vmatprep.subr.bf16.mxu0 0
    %253 = vmatpush1.bf16.msra.mxu0 0
    %254 = vmatprep.subr.bf16.mxu0 0
    %255 = vmatpush1.bf16.msra.mxu0 0
    %256 = vmatprep.subr.bf16.mxu0 0
    %257 = vmatpush1.bf16.msra.mxu0 0
    %258 = vmatprep.subr.bf16.mxu0 0
    %259 = vmatpush1.bf16.msra.mxu0 0
    %260 = vmatprep.subr.bf16.mxu0 0
    %261 = vmatpush1.bf16.msra.mxu0 0
    %262 = vmatprep.subr.bf16.mxu0 0
    %263 = vmatpush1.bf16.msra.mxu0 0
    %264 = vmatprep.subr.bf16.mxu0 0
    %265 = vmatpush1.bf16.msra.mxu0 0
    %266 = vmatprep.subr.bf16.mxu0 0
    %267 = vmatpush1.bf16.msra.mxu0 0
    %268 = vmatprep.subr.bf16.mxu0 0
    %269 = vmatpush1.bf16.msra.mxu0 0
    %270 = vmatprep.mubr.bf16.mxu0 0
    %271 = vmatmul.mubr.bf16.gmra.mrb[0].mxu0 %v236
    %v272 = vpop.f32.mrb[0].mxu0
    %v273 = vadd.f32 0.0, %v272
    %v274 = vpop.f32.mrb[0].mxu0
    %v275 = vpop.f32.mrb[0].mxu0
    %v276 = vadd.f32 0.0, %v275
    %v277 = vpop.f32.mrb[0].mxu0
    %278 = vdwg.mxu0
    %v279 = vpack.c.bf16 %v276, %v273
    %v280 = vld [vmem:[%s4] sm:$0xf]
    %281 = vrot.lane.b32.xlu0 %v152, 120
    %v282 = vpop.permute.xlu0 %281
    %283 = vrot.lane.b32.xlu0 %v152, 88
    %v284 = vpop.permute.xlu0 %283
    %v286 = vsel %vm156, %v282, 0
    %v289 = vsel %vm156, %v284, 0
    %291 = vmatprep.subr.bf16.mxu0 0
    %292 = vmatpush1.bf16.xpose.msra.mxu0 %v289
    %293 = vmatprep.subr.bf16.mxu0 0
    %294 = vmatpush1.bf16.xpose.msra.mxu0 0
    %295 = vmatprep.subr.bf16.mxu0 0
    %296 = vmatpush1.bf16.xpose.msra.mxu0 0
    %297 = vmatprep.subr.bf16.mxu0 0
    %298 = vmatpush1.bf16.xpose.msra.mxu0 0
    %299 = vmatprep.subr.bf16.mxu0 0
    %300 = vmatpush1.bf16.xpose.msra.mxu0 0
    %301 = vmatprep.subr.bf16.mxu0 0
    %302 = vmatpush1.bf16.xpose.msra.mxu0 0
    %303 = vmatprep.subr.bf16.mxu0 0
    %304 = vmatpush1.bf16.xpose.msra.mxu0 0
    %305 = vmatprep.subr.bf16.mxu0 0
    %306 = vmatpush1.bf16.xpose.msra.mxu0 0
    %307 = vmatprep.subr.bf16.mxu0 0
    %308 = vmatpush1.bf16.xpose.msra.mxu0 0
    %309 = vmatprep.subr.bf16.mxu0 0
    %310 = vmatpush1.bf16.xpose.msra.mxu0 0
    %311 = vmatprep.subr.bf16.mxu0 0
    %312 = vmatpush1.bf16.xpose.msra.mxu0 0
    %313 = vmatprep.subr.bf16.mxu0 0
    %314 = vmatpush1.bf16.xpose.msra.mxu0 0
    %315 = vmatprep.subr.bf16.mxu0 0
    %316 = vmatpush1.bf16.xpose.msra.mxu0 0
    %317 = vmatprep.subr.bf16.mxu0 0
    %318 = vmatpush1.bf16.xpose.msra.mxu0 0
    %319 = vmatprep.subr.bf16.mxu0 0
    %320 = vmatpush1.bf16.xpose.msra.mxu0 0
    %321 = vmatprep.subr.bf16.mxu0 0
    %322 = vmatpush1.bf16.xpose.msra.mxu0 0
    %323 = vmatprep.mubr.bf16.mxu0 0
    %324 = vmatmul.mubr.bf16.gmra.mrb[0].mxu0 %v286
    %v325 = vpop.f32.mrb[0].mxu0
    %v326 = vadd.f32 0.0, %v325
    %v327 = vpop.f32.mrb[0].mxu0
    %v328 = vpop.f32.mrb[0].mxu0
    %v329 = vadd.f32 0.0, %v328
    %v330 = vpop.f32.mrb[0].mxu0
    %331 = vdwg.mxu0
    %v332 = vmul.f32 %v326, 0.35355338
    %v333 = vmul.f32 %v329, 0.35355338
    %v334 = vadd.f32 %v332, %v41
    %v335 = vadd.f32 %v333, %v42
    %v336 = vsel %vm208, %v334, -inf
    %337 = vmax.xlane.f32.xlu0 %v336
    %v338 = vpop.xlane.xlu0 %337
    %v339 = vsel %vm208, %v335, -inf
    %340 = vmax.xlane.f32.xlu0 %v339
    %v341 = vpop.xlane.xlu0 %340
    %v342 = vsub.f32 %v334, %v338
    %v343 = vsub.f32 %v335, %v341
    %v344 = vmul.f32 %v342, 1.442695
    %v345 = vpow.pop %v344
    %v346 = vmul.f32 %v343, 1.442695
    %v347 = vpow.pop %v346
    %v348 = vsel %vm208, %v345, 0.0
    %349 = vadd.xlane.f32.xlu0 %v348
    %v350 = vpop.xlane.xlu0 %349
    %v351 = vsel %vm208, %v347, 0.0
    %352 = vadd.xlane.f32.xlu0 %v351
    %v353 = vpop.xlane.xlu0 %352
    %v354 = vrcp.pop %v350
    %v355 = vrcp.pop %v353
    %v356 = vmul.f32 %v345, %v354
    %v357 = vmul.f32 %v347, %v355
    %v358 = vpack.c.bf16 %v357, %v356
    %359 = vrot.lane.b32.xlu0 %v152, 56
    %v360 = vpop.permute.xlu0 %359
    %v363 = vsel %vm208, %v358, 0
    %365 = vmatprep.subr.bf16.mxu0 0
    %366 = vmatpush1.bf16.msra.mxu0 %v360
    %367 = vmatprep.subr.bf16.mxu0 0
    %368 = vmatpush1.bf16.msra.mxu0 0
    %369 = vmatprep.subr.bf16.mxu0 0
    %370 = vmatpush1.bf16.msra.mxu0 0
    %371 = vmatprep.subr.bf16.mxu0 0
    %372 = vmatpush1.bf16.msra.mxu0 0
    %373 = vmatprep.subr.bf16.mxu0 0
    %374 = vmatpush1.bf16.msra.mxu0 0
    %375 = vmatprep.subr.bf16.mxu0 0
    %376 = vmatpush1.bf16.msra.mxu0 0
    %377 = vmatprep.subr.bf16.mxu0 0
    %378 = vmatpush1.bf16.msra.mxu0 0
    %379 = vmatprep.subr.bf16.mxu0 0
    %380 = vmatpush1.bf16.msra.mxu0 0
    %381 = vmatprep.subr.bf16.mxu0 0
    %382 = vmatpush1.bf16.msra.mxu0 0
    %383 = vmatprep.subr.bf16.mxu0 0
    %384 = vmatpush1.bf16.msra.mxu0 0
    %385 = vmatprep.subr.bf16.mxu0 0
    %386 = vmatpush1.bf16.msra.mxu0 0
    %387 = vmatprep.subr.bf16.mxu0 0
    %388 = vmatpush1.bf16.msra.mxu0 0
    %389 = vmatprep.subr.bf16.mxu0 0
    %390 = vmatpush1.bf16.msra.mxu0 0
    %391 = vmatprep.subr.bf16.mxu0 0
    %392 = vmatpush1.bf16.msra.mxu0 0
    %393 = vmatprep.subr.bf16.mxu0 0
    %394 = vmatpush1.bf16.msra.mxu0 0
    %395 = vmatprep.subr.bf16.mxu0 0
    %396 = vmatpush1.bf16.msra.mxu0 0
    %397 = vmatprep.mubr.bf16.mxu0 0
    %398 = vmatmul.mubr.bf16.gmra.mrb[0].mxu0 %v363
    %v399 = vpop.f32.mrb[0].mxu0
    %v400 = vadd.f32 0.0, %v399
    %v401 = vpop.f32.mrb[0].mxu0
    %v402 = vpop.f32.mrb[0].mxu0
    %v403 = vadd.f32 0.0, %v402
    %v404 = vpop.f32.mrb[0].mxu0
    %405 = vdwg.mxu0
    %v406 = vpack.c.bf16 %v403, %v400
    %v407 = vld [vmem:[%s4 + $0x4] sm:$0xf]
    %v409 = vsel %vm156, %v406, 0
    %vm411 = vcmask 1043456
    %v413 = vsel %vm411, %v407, 0
    %415 = vmatprep.subr.bf16.mxu0 0
    %416 = vmatpush1.bf16.msra.mxu0 %v413
    %417 = vmatprep.subr.bf16.mxu0 0
    %418 = vmatpush1.bf16.msra.mxu0 0
    %419 = vmatprep.subr.bf16.mxu0 0
    %420 = vmatpush1.bf16.msra.mxu0 0
    %421 = vmatprep.subr.bf16.mxu0 0
    %422 = vmatpush1.bf16.msra.mxu0 0
    %423 = vmatprep.subr.bf16.mxu0 0
    %424 = vmatpush1.bf16.msra.mxu0 0
    %425 = vmatprep.subr.bf16.mxu0 0
    %426 = vmatpush1.bf16.msra.mxu0 0
    %427 = vmatprep.subr.bf16.mxu0 0
    %428 = vmatpush1.bf16.msra.mxu0 0
    %429 = vmatprep.subr.bf16.mxu0 0
    %430 = vmatpush1.bf16.msra.mxu0 0
    %431 = vmatprep.subr.bf16.mxu0 0
    %432 = vmatpush1.bf16.msra.mxu0 0
    %433 = vmatprep.subr.bf16.mxu0 0
    %434 = vmatpush1.bf16.msra.mxu0 0
    %435 = vmatprep.subr.bf16.mxu0 0
    %436 = vmatpush1.bf16.msra.mxu0 0
    %437 = vmatprep.subr.bf16.mxu0 0
    %438 = vmatpush1.bf16.msra.mxu0 0
    %439 = vmatprep.subr.bf16.mxu0 0
    %440 = vmatpush1.bf16.msra.mxu0 0
    %441 = vmatprep.subr.bf16.mxu0 0
    %442 = vmatpush1.bf16.msra.mxu0 0
    %443 = vmatprep.subr.bf16.mxu0 0
    %444 = vmatpush1.bf16.msra.mxu0 0
    %445 = vmatprep.subr.bf16.mxu0 0
    %446 = vmatpush1.bf16.msra.mxu0 0
    %447 = vmatprep.mubr.bf16.mxu0 0
    %448 = vmatmul.mubr.bf16.gmra.mrb[0].mxu0 %v409
    %v449 = vpop.f32.mrb[0].mxu0
    %v450 = vadd.f32 0.0, %v449
    %v451 = vpop.f32.mrb[0].mxu0
    %v452 = vpop.f32.mrb[0].mxu0
    %v453 = vadd.f32 0.0, %v452
    %v454 = vpop.f32.mrb[0].mxu0
    %455 = vdwg.mxu0
    %v457 = vsel %vm156, %v279, 0
    %v460 = vsel %vm411, %v280, 0
    %462 = vmatprep.subr.bf16.mxu0 0
    %463 = vmatpush1.bf16.msra.mxu0 %v460
    %464 = vmatprep.subr.bf16.mxu0 0
    %465 = vmatpush1.bf16.msra.mxu0 0
    %466 = vmatprep.subr.bf16.mxu0 0
    %467 = vmatpush1.bf16.msra.mxu0 0
    %468 = vmatprep.subr.bf16.mxu0 0
    %469 = vmatpush1.bf16.msra.mxu0 0
    %470 = vmatprep.subr.bf16.mxu0 0
    %471 = vmatpush1.bf16.msra.mxu0 0
    %472 = vmatprep.subr.bf16.mxu0 0
    %473 = vmatpush1.bf16.msra.mxu0 0
    %474 = vmatprep.subr.bf16.mxu0 0
    %475 = vmatpush1.bf16.msra.mxu0 0
    %476 = vmatprep.subr.bf16.mxu0 0
    %477 = vmatpush1.bf16.msra.mxu0 0
    %478 = vmatprep.subr.bf16.mxu0 0
    %479 = vmatpush1.bf16.msra.mxu0 0
    %480 = vmatprep.subr.bf16.mxu0 0
    %481 = vmatpush1.bf16.msra.mxu0 0
    %482 = vmatprep.subr.bf16.mxu0 0
    %483 = vmatpush1.bf16.msra.mxu0 0
    %484 = vmatprep.subr.bf16.mxu0 0
    %485 = vmatpush1.bf16.msra.mxu0 0
    %486 = vmatprep.subr.bf16.mxu0 0
    %487 = vmatpush1.bf16.msra.mxu0 0
    %488 = vmatprep.subr.bf16.mxu0 0
    %489 = vmatpush1.bf16.msra.mxu0 0
    %490 = vmatprep.subr.bf16.mxu0 0
    %491 = vmatpush1.bf16.msra.mxu0 0
    %492 = vmatprep.subr.bf16.mxu0 0
    %493 = vmatpush1.bf16.msra.mxu0 0
    %494 = vmatprep.mubr.bf16.mxu0 0
    %495 = vmatmul.mubr.bf16.gmra.mrb[0].mxu0 %v457
    %v496 = vpop.f32.mrb[0].mxu0
    %v497 = vadd.f32 %v450, %v496
    %v498 = vpop.f32.mrb[0].mxu0
    %v499 = vpop.f32.mrb[0].mxu0
    %v500 = vadd.f32 %v453, %v499
    %v501 = vpop.f32.mrb[0].mxu0
    %502 = vdwg.mxu0
    %503 = vrot.lane.b32.xlu0 %v152, 112
    %v504 = vpop.permute.xlu0 %503
    %505 = vrot.lane.b32.xlu0 %v152, 80
    %v506 = vpop.permute.xlu0 %505
    %v508 = vsel %vm156, %v504, 0
    %v511 = vsel %vm156, %v506, 0
    %513 = vmatprep.subr.bf16.mxu0 0
    %514 = vmatpush1.bf16.xpose.msra.mxu0 %v511
    %515 = vmatprep.subr.bf16.mxu0 0
    %516 = vmatpush1.bf16.xpose.msra.mxu0 0
    %517 = vmatprep.subr.bf16.mxu0 0
    %518 = vmatpush1.bf16.xpose.msra.mxu0 0
    %519 = vmatprep.subr.bf16.mxu0 0
    %520 = vmatpush1.bf16.xpose.msra.mxu0 0
    %521 = vmatprep.subr.bf16.mxu0 0
    %522 = vmatpush1.bf16.xpose.msra.mxu0 0
    %523 = vmatprep.subr.bf16.mxu0 0
    %524 = vmatpush1.bf16.xpose.msra.mxu0 0
    %525 = vmatprep.subr.bf16.mxu0 0
    %526 = vmatpush1.bf16.xpose.msra.mxu0 0
    %527 = vmatprep.subr.bf16.mxu0 0
    %528 = vmatpush1.bf16.xpose.msra.mxu0 0
    %529 = vmatprep.subr.bf16.mxu0 0
    %530 = vmatpush1.bf16.xpose.msra.mxu0 0
    %531 = vmatprep.subr.bf16.mxu0 0
    %532 = vmatpush1.bf16.xpose.msra.mxu0 0
    %533 = vmatprep.subr.bf16.mxu0 0
    %534 = vmatpush1.bf16.xpose.msra.mxu0 0
    %535 = vmatprep.subr.bf16.mxu0 0
    %536 = vmatpush1.bf16.xpose.msra.mxu0 0
    %537 = vmatprep.subr.bf16.mxu0 0
    %538 = vmatpush1.bf16.xpose.msra.mxu0 0
    %539 = vmatprep.subr.bf16.mxu0 0
    %540 = vmatpush1.bf16.xpose.msra.mxu0 0
    %541 = vmatprep.subr.bf16.mxu0 0
    %542 = vmatpush1.bf16.xpose.msra.mxu0 0
    %543 = vmatprep.subr.bf16.mxu0 0
    %544 = vmatpush1.bf16.xpose.msra.mxu0 0
    %545 = vmatprep.mubr.bf16.mxu0 0
    %546 = vmatmul.mubr.bf16.gmra.mrb[0].mxu0 %v508
    %v547 = vpop.f32.mrb[0].mxu0
    %v548 = vadd.f32 0.0, %v547
    %v549 = vpop.f32.mrb[0].mxu0
    %v550 = vpop.f32.mrb[0].mxu0
    %v551 = vadd.f32 0.0, %v550
    %v552 = vpop.f32.mrb[0].mxu0
    %553 = vdwg.mxu0
    %v554 = vmul.f32 %v548, 0.35355338
    %v555 = vmul.f32 %v551, 0.35355338
    %v556 = vadd.f32 %v554, %v41
    %v557 = vadd.f32 %v555, %v42
    %v558 = vsel %vm208, %v556, -inf
    %559 = vmax.xlane.f32.xlu0 %v558
    %v560 = vpop.xlane.xlu0 %559
    %v561 = vsel %vm208, %v557, -inf
    %562 = vmax.xlane.f32.xlu0 %v561
    %v563 = vpop.xlane.xlu0 %562
    %v564 = vsub.f32 %v556, %v560
    %v565 = vsub.f32 %v557, %v563
    %v566 = vmul.f32 %v564, 1.442695
    %v567 = vpow.pop %v566
    %v568 = vmul.f32 %v565, 1.442695
    %v569 = vpow.pop %v568
    %v570 = vsel %vm208, %v567, 0.0
    %571 = vadd.xlane.f32.xlu0 %v570
    %v572 = vpop.xlane.xlu0 %571
    %v573 = vsel %vm208, %v569, 0.0
    %574 = vadd.xlane.f32.xlu0 %v573
    %v575 = vpop.xlane.xlu0 %574
    %v576 = vrcp.pop %v572
    %v577 = vrcp.pop %v575
    %v578 = vmul.f32 %v567, %v576
    %v579 = vmul.f32 %v569, %v577
    %v580 = vpack.c.bf16 %v579, %v578
    %581 = vrot.lane.b32.xlu0 %v152, 48
    %v582 = vpop.permute.xlu0 %581
    %v585 = vsel %vm208, %v580, 0
    %587 = vmatprep.subr.bf16.mxu0 0
    %588 = vmatpush1.bf16.msra.mxu0 %v582
    %589 = vmatprep.subr.bf16.mxu0 0
    %590 = vmatpush1.bf16.msra.mxu0 0
    %591 = vmatprep.subr.bf16.mxu0 0
    %592 = vmatpush1.bf16.msra.mxu0 0
    %593 = vmatprep.subr.bf16.mxu0 0
    %594 = vmatpush1.bf16.msra.mxu0 0
    %595 = vmatprep.subr.bf16.mxu0 0
    %596 = vmatpush1.bf16.msra.mxu0 0
    %597 = vmatprep.subr.bf16.mxu0 0
    %598 = vmatpush1.bf16.msra.mxu0 0
    %599 = vmatprep.subr.bf16.mxu0 0
    %600 = vmatpush1.bf16.msra.mxu0 0
    %601 = vmatprep.subr.bf16.mxu0 0
    %602 = vmatpush1.bf16.msra.mxu0 0
    %603 = vmatprep.subr.bf16.mxu0 0
    %604 = vmatpush1.bf16.msra.mxu0 0
    %605 = vmatprep.subr.bf16.mxu0 0
    %606 = vmatpush1.bf16.msra.mxu0 0
    %607 = vmatprep.subr.bf16.mxu0 0
    %608 = vmatpush1.bf16.msra.mxu0 0
    %609 = vmatprep.subr.bf16.mxu0 0
    %610 = vmatpush1.bf16.msra.mxu0 0
    %611 = vmatprep.subr.bf16.mxu0 0
    %612 = vmatpush1.bf16.msra.mxu0 0
    %613 = vmatprep.subr.bf16.mxu0 0
    %614 = vmatpush1.bf16.msra.mxu0 0
    %615 = vmatprep.subr.bf16.mxu0 0
    %616 = vmatpush1.bf16.msra.mxu0 0
    %617 = vmatprep.subr.bf16.mxu0 0
    %618 = vmatpush1.bf16.msra.mxu0 0
    %619 = vmatprep.mubr.bf16.mxu0 0
    %620 = vmatmul.mubr.bf16.gmra.mrb[0].mxu0 %v585
    %v621 = vpop.f32.mrb[0].mxu0
    %v622 = vadd.f32 0.0, %v621
    %v623 = vpop.f32.mrb[0].mxu0
    %v624 = vpop.f32.mrb[0].mxu0
    %v625 = vadd.f32 0.0, %v624
    %v626 = vpop.f32.mrb[0].mxu0
    %627 = vdwg.mxu0
    %v628 = vpack.c.bf16 %v625, %v622
    %v629 = vld [vmem:[%s4 + $0x8] sm:$0xf]
    %v631 = vsel %vm156, %v628, 0
    %v634 = vsel %vm411, %v629, 0
    %636 = vmatprep.subr.bf16.mxu0 0
    %637 = vmatpush1.bf16.msra.mxu0 %v634
    %638 = vmatprep.subr.bf16.mxu0 0
    %639 = vmatpush1.bf16.msra.mxu0 0
    %640 = vmatprep.subr.bf16.mxu0 0
    %641 = vmatpush1.bf16.msra.mxu0 0
    %642 = vmatprep.subr.bf16.mxu0 0
    %643 = vmatpush1.bf16.msra.mxu0 0
    %644 = vmatprep.subr.bf16.mxu0 0
    %645 = vmatpush1.bf16.msra.mxu0 0
    %646 = vmatprep.subr.bf16.mxu0 0
    %647 = vmatpush1.bf16.msra.mxu0 0
    %648 = vmatprep.subr.bf16.mxu0 0
    %649 = vmatpush1.bf16.msra.mxu0 0
    %650 = vmatprep.subr.bf16.mxu0 0
    %651 = vmatpush1.bf16.msra.mxu0 0
    %652 = vmatprep.subr.bf16.mxu0 0
    %653 = vmatpush1.bf16.msra.mxu0 0
    %654 = vmatprep.subr.bf16.mxu0 0
    %655 = vmatpush1.bf16.msra.mxu0 0
    %656 = vmatprep.subr.bf16.mxu0 0
    %657 = vmatpush1.bf16.msra.mxu0 0
    %658 = vmatprep.subr.bf16.mxu0 0
    %659 = vmatpush1.bf16.msra.mxu0 0
    %660 = vmatprep.subr.bf16.mxu0 0
    %661 = vmatpush1.bf16.msra.mxu0 0
    %662 = vmatprep.subr.bf16.mxu0 0
    %663 = vmatpush1.bf16.msra.mxu0 0
    %664 = vmatprep.subr.bf16.mxu0 0
    %665 = vmatpush1.bf16.msra.mxu0 0
    %666 = vmatprep.subr.bf16.mxu0 0
    %667 = vmatpush1.bf16.msra.mxu0 0
    %668 = vmatprep.mubr.bf16.mxu0 0
    %669 = vmatmul.mubr.bf16.gmra.mrb[0].mxu0 %v631
    %v670 = vpop.f32.mrb[0].mxu0
    %v671 = vadd.f32 0.0, %v670
    %v672 = vpop.f32.mrb[0].mxu0
    %v673 = vpop.f32.mrb[0].mxu0
    %v674 = vadd.f32 0.0, %v673
    %v675 = vpop.f32.mrb[0].mxu0
    %676 = vdwg.mxu0
    %v677 = vadd.f32 %v497, %v671
    %v678 = vadd.f32 %v500, %v674
    %679 = vrot.lane.b32.xlu0 %v152, 104
    %v680 = vpop.permute.xlu0 %679
    %681 = vrot.lane.b32.xlu0 %v152, 72
    %v682 = vpop.permute.xlu0 %681
    %v684 = vsel %vm156, %v680, 0
    %v687 = vsel %vm156, %v682, 0
    %689 = vmatprep.subr.bf16.mxu0 0
    %690 = vmatpush1.bf16.xpose.msra.mxu0 %v687
    %691 = vmatprep.subr.bf16.mxu0 0
    %692 = vmatpush1.bf16.xpose.msra.mxu0 0
    %693 = vmatprep.subr.bf16.mxu0 0
    %694 = vmatpush1.bf16.xpose.msra.mxu0 0
    %695 = vmatprep.subr.bf16.mxu0 0
    %696 = vmatpush1.bf16.xpose.msra.mxu0 0
    %697 = vmatprep.subr.bf16.mxu0 0
    %698 = vmatpush1.bf16.xpose.msra.mxu0 0
    %699 = vmatprep.subr.bf16.mxu0 0
    %700 = vmatpush1.bf16.xpose.msra.mxu0 0
    %701 = vmatprep.subr.bf16.mxu0 0
    %702 = vmatpush1.bf16.xpose.msra.mxu0 0
    %703 = vmatprep.subr.bf16.mxu0 0
    %704 = vmatpush1.bf16.xpose.msra.mxu0 0
    %705 = vmatprep.subr.bf16.mxu0 0
    %706 = vmatpush1.bf16.xpose.msra.mxu0 0
    %707 = vmatprep.subr.bf16.mxu0 0
    %708 = vmatpush1.bf16.xpose.msra.mxu0 0
    %709 = vmatprep.subr.bf16.mxu0 0
    %710 = vmatpush1.bf16.xpose.msra.mxu0 0
    %711 = vmatprep.subr.bf16.mxu0 0
    %712 = vmatpush1.bf16.xpose.msra.mxu0 0
    %713 = vmatprep.subr.bf16.mxu0 0
    %714 = vmatpush1.bf16.xpose.msra.mxu0 0
    %715 = vmatprep.subr.bf16.mxu0 0
    %716 = vmatpush1.bf16.xpose.msra.mxu0 0
    %717 = vmatprep.subr.bf16.mxu0 0
    %718 = vmatpush1.bf16.xpose.msra.mxu0 0
    %719 = vmatprep.subr.bf16.mxu0 0
    %720 = vmatpush1.bf16.xpose.msra.mxu0 0
    %721 = vmatprep.mubr.bf16.mxu0 0
    %722 = vmatmul.mubr.bf16.gmra.mrb[0].mxu0 %v684
    %v723 = vpop.f32.mrb[0].mxu0
    %v724 = vadd.f32 0.0, %v723
    %v725 = vpop.f32.mrb[0].mxu0
    %v726 = vpop.f32.mrb[0].mxu0
    %v727 = vadd.f32 0.0, %v726
    %v728 = vpop.f32.mrb[0].mxu0
    %729 = vdwg.mxu0
    %v730 = vmul.f32 %v724, 0.35355338
    %v731 = vmul.f32 %v727, 0.35355338
    %v732 = vadd.f32 %v730, %v41
    %v733 = vadd.f32 %v731, %v42
    %v734 = vsel %vm208, %v732, -inf
    %735 = vmax.xlane.f32.xlu0 %v734
    %v736 = vpop.xlane.xlu0 %735
    %v737 = vsel %vm208, %v733, -inf
    %738 = vmax.xlane.f32.xlu0 %v737
    %v739 = vpop.xlane.xlu0 %738
    %v740 = vsub.f32 %v732, %v736
    %v741 = vsub.f32 %v733, %v739
    %v742 = vmul.f32 %v740, 1.442695
    %v743 = vpow.pop %v742
    %v744 = vmul.f32 %v741, 1.442695
    %v745 = vpow.pop %v744
    %v746 = vsel %vm208, %v743, 0.0
    %747 = vadd.xlane.f32.xlu0 %v746
    %v748 = vpop.xlane.xlu0 %747
    %v749 = vsel %vm208, %v745, 0.0
    %750 = vadd.xlane.f32.xlu0 %v749
    %v751 = vpop.xlane.xlu0 %750
    %v752 = vrcp.pop %v748
    %v753 = vrcp.pop %v751
    %v754 = vmul.f32 %v743, %v752
    %v755 = vmul.f32 %v745, %v753
    %v756 = vpack.c.bf16 %v755, %v754
    %757 = vrot.lane.b32.xlu0 %v152, 40
    %v758 = vpop.permute.xlu0 %757
    %v761 = vsel %vm208, %v756, 0
    %763 = vmatprep.subr.bf16.mxu0 0
    %764 = vmatpush1.bf16.msra.mxu0 %v758
    %765 = vmatprep.subr.bf16.mxu0 0
    %766 = vmatpush1.bf16.msra.mxu0 0
    %767 = vmatprep.subr.bf16.mxu0 0
    %768 = vmatpush1.bf16.msra.mxu0 0
    %769 = vmatprep.subr.bf16.mxu0 0
    %770 = vmatpush1.bf16.msra.mxu0 0
    %771 = vmatprep.subr.bf16.mxu0 0
    %772 = vmatpush1.bf16.msra.mxu0 0
    %773 = vmatprep.subr.bf16.mxu0 0
    %774 = vmatpush1.bf16.msra.mxu0 0
    %775 = vmatprep.subr.bf16.mxu0 0
    %776 = vmatpush1.bf16.msra.mxu0 0
    %777 = vmatprep.subr.bf16.mxu0 0
    %778 = vmatpush1.bf16.msra.mxu0 0
    %779 = vmatprep.subr.bf16.mxu0 0
    %780 = vmatpush1.bf16.msra.mxu0 0
    %781 = vmatprep.subr.bf16.mxu0 0
    %782 = vmatpush1.bf16.msra.mxu0 0
    %783 = vmatprep.subr.bf16.mxu0 0
    %784 = vmatpush1.bf16.msra.mxu0 0
    %785 = vmatprep.subr.bf16.mxu0 0
    %786 = vmatpush1.bf16.msra.mxu0 0
    %787 = vmatprep.subr.bf16.mxu0 0
    %788 = vmatpush1.bf16.msra.mxu0 0
    %789 = vmatprep.subr.bf16.mxu0 0
    %790 = vmatpush1.bf16.msra.mxu0 0
    %791 = vmatprep.subr.bf16.mxu0 0
    %792 = vmatpush1.bf16.msra.mxu0 0
    %793 = vmatprep.subr.bf16.mxu0 0
    %794 = vmatpush1.bf16.msra.mxu0 0
    %795 = vmatprep.mubr.bf16.mxu0 0
    %796 = vmatmul.mubr.bf16.gmra.mrb[0].mxu0 %v761
    %v797 = vpop.f32.mrb[0].mxu0
    %v798 = vadd.f32 0.0, %v797
    %v799 = vpop.f32.mrb[0].mxu0
    %v800 = vpop.f32.mrb[0].mxu0
    %v801 = vadd.f32 0.0, %v800
    %v802 = vpop.f32.mrb[0].mxu0
    %803 = vdwg.mxu0
    %v804 = vpack.c.bf16 %v801, %v798
    %v805 = vld [vmem:[%s4 + $0xc] sm:$0xf]
    %v807 = vsel %vm156, %v804, 0
    %v810 = vsel %vm411, %v805, 0
    %812 = vmatprep.subr.bf16.mxu0 0
    %813 = vmatpush1.bf16.msra.mxu0 %v810
    %814 = vmatprep.subr.bf16.mxu0 0
    %815 = vmatpush1.bf16.msra.mxu0 0
    %816 = vmatprep.subr.bf16.mxu0 0
    %817 = vmatpush1.bf16.msra.mxu0 0
    %818 = vmatprep.subr.bf16.mxu0 0
    %819 = vmatpush1.bf16.msra.mxu0 0
    %820 = vmatprep.subr.bf16.mxu0 0
    %821 = vmatpush1.bf16.msra.mxu0 0
    %822 = vmatprep.subr.bf16.mxu0 0
    %823 = vmatpush1.bf16.msra.mxu0 0
    %824 = vmatprep.subr.bf16.mxu0 0
    %825 = vmatpush1.bf16.msra.mxu0 0
    %826 = vmatprep.subr.bf16.mxu0 0
    %827 = vmatpush1.bf16.msra.mxu0 0
    %828 = vmatprep.subr.bf16.mxu0 0
    %829 = vmatpush1.bf16.msra.mxu0 0
    %830 = vmatprep.subr.bf16.mxu0 0
    %831 = vmatpush1.bf16.msra.mxu0 0
    %832 = vmatprep.subr.bf16.mxu0 0
    %833 = vmatpush1.bf16.msra.mxu0 0
    %834 = vmatprep.subr.bf16.mxu0 0
    %835 = vmatpush1.bf16.msra.mxu0 0
    %836 = vmatprep.subr.bf16.mxu0 0
    %837 = vmatpush1.bf16.msra.mxu0 0
    %838 = vmatprep.subr.bf16.mxu0 0
    %839 = vmatpush1.bf16.msra.mxu0 0
    %840 = vmatprep.subr.bf16.mxu0 0
    %841 = vmatpush1.bf16.msra.mxu0 0
    %842 = vmatprep.subr.bf16.mxu0 0
    %843 = vmatpush1.bf16.msra.mxu0 0
    %844 = vmatprep.mubr.bf16.mxu0 0
    %845 = vmatmul.mubr.bf16.gmra.mrb[0].mxu0 %v807
    %v846 = vpop.f32.mrb[0].mxu0
    %v847 = vadd.f32 0.0, %v846
    %v848 = vpop.f32.mrb[0].mxu0
    %v849 = vpop.f32.mrb[0].mxu0
    %v850 = vadd.f32 0.0, %v849
    %v851 = vpop.f32.mrb[0].mxu0
    %852 = vdwg.mxu0
    %v853 = vadd.f32 %v677, %v847
    %v854 = vadd.f32 %v678, %v850
    %v855 = vadd.f32 %v37, %v853
    %v856 = vadd.f32 %v38, %v854
    %v857 = vlaneseq
    %v858 = vshrl.u32 %v857, 7
    %v859 = vsub.s32 4, %v858
    %v860 = vrot.slane %v43, %v859
    %v861 = vadd.f32 %v855, %v860
    %v862 = vadd.f32 %v856, %v860
    %864 = vset.pattern.permute.xlu0 0
    %865 = vperm.xlu0 %864, %v39
    %v866 = vpop.permute.xlu0 %865
    %869 = vset.pattern.permute.xlu0 0
    %870 = vperm.xlu0 %869, %v40
    %v871 = vpop.permute.xlu0 %870
    %v873 = vmul.f32 %v861, %v866
    %v874 = vmul.f32 %v862, %v871
    %v875 = vsel %vm44, %v873, 0.0
    %876 = vadd.xlane.f32.xlu0 %v875
    %v877 = vpop.xlane.xlu0 %876
    %v878 = vsel %vm44, %v874, 0.0
    %879 = vadd.xlane.f32.xlu0 %v878
    %v880 = vpop.xlane.xlu0 %879
    %v881 = vmul.f32 %v877, %v51
    %v882 = vmul.f32 %v880, %v51
    %v883 = vsub.f32 %v873, %v881
    %v884 = vsub.f32 %v874, %v882
    %v885 = vmul.f32 %v883, %v883
    %v886 = vmul.f32 %v884, %v884
    %v887 = vsel %vm44, %v885, 0.0
    %888 = vadd.xlane.f32.xlu0 %v887
    %v889 = vpop.xlane.xlu0 %888
    %v890 = vsel %vm44, %v886, 0.0
    %891 = vadd.xlane.f32.xlu0 %v890
    %v892 = vpop.xlane.xlu0 %891
    %v893 = vmul.f32 %v889, %v51
    %v894 = vmul.f32 %v892, %v51
    %v895 = vadd.f32 %v893, 1e-05
    %v896 = vadd.f32 %v894, 1e-05
    %v897 = vrsqrt.pop %v895
    %v898 = vrsqrt.pop %v896
    %v899 = vmul.f32 %v883, %v897
    %v900 = vmul.f32 %v884, %v898
    %v901 = vlaneseq
    %v902 = vshrl.u32 %v901, 7
    %v903 = vsub.s32 2, %v902
    %v904 = vrot.slane %v43, %v903
    %v905 = vmul.f32 %v899, %v904
    %v906 = vmul.f32 %v900, %v904
    %v907 = vlaneseq
    %v908 = vshrl.u32 %v907, 7
    %v909 = vsub.s32 3, %v908
    %v910 = vrot.slane %v43, %v909
    %v911 = vadd.f32 %v905, %v910
    %v912 = vadd.f32 %v906, %v910
    %v913 = vpack.c.bf16 %v912, %v911
    %v914 = vld [vmem:[%s5] sm:$0xf]
    %v915 = vld [vmem:[%s5 + $0x4] sm:$0xf]
    %v916 = vld [vmem:[%s5 + $0x8] sm:$0xf]
    %v917 = vld [vmem:[%s5 + $0xc] sm:$0xf]
    %v918 = vld [vmem:[%s9] sm:$0x1]
    %v920 = vlaneseq
    %v921 = vshrl.u32 %v920, 7
    %v922 = vsub.s32 0, %v921
    %v923 = vrot.slane %v918, %v922
    %v929 = vunpack.c.l.b16 %v914
    %v930 = vunpack.c.l.b16 %v915
    %v931 = vunpack.c.l.b16 %v916
    %v932 = vunpack.c.l.b16 %v917
    %v933 = vpack.c.b16 %v930, %v929
    %v934 = vpack.c.b16 %v932, %v931
    %v938 = vsel %vm44, %v913, 0
    %940 = vmatprep.subr.bf16.mxu0 0
    %941 = vmatpush1.bf16.msra.mxu0 %v933
    %942 = vmatprep.subr.bf16.mxu0 0
    %943 = vmatpush1.bf16.msra.mxu0 %v934
    %944 = vmatprep.subr.bf16.mxu0 0
    %945 = vmatpush1.bf16.msra.mxu0 0
    %946 = vmatprep.subr.bf16.mxu0 0
    %947 = vmatpush1.bf16.msra.mxu0 0
    %948 = vmatprep.subr.bf16.mxu0 0
    %949 = vmatpush1.bf16.msra.mxu0 0
    %950 = vmatprep.subr.bf16.mxu0 0
    %951 = vmatpush1.bf16.msra.mxu0 0
    %952 = vmatprep.subr.bf16.mxu0 0
    %953 = vmatpush1.bf16.msra.mxu0 0
    %954 = vmatprep.subr.bf16.mxu0 0
    %955 = vmatpush1.bf16.msra.mxu0 0
    %956 = vmatprep.subr.bf16.mxu0 0
    %957 = vmatpush1.bf16.msra.mxu0 0
    %958 = vmatprep.subr.bf16.mxu0 0
    %959 = vmatpush1.bf16.msra.mxu0 0
    %960 = vmatprep.subr.bf16.mxu0 0
    %961 = vmatpush1.bf16.msra.mxu0 0
    %962 = vmatprep.subr.bf16.mxu0 0
    %963 = vmatpush1.bf16.msra.mxu0 0
    %964 = vmatprep.subr.bf16.mxu0 0
    %965 = vmatpush1.bf16.msra.mxu0 0
    %966 = vmatprep.subr.bf16.mxu0 0
    %967 = vmatpush1.bf16.msra.mxu0 0
    %968 = vmatprep.subr.bf16.mxu0 0
    %969 = vmatpush1.bf16.msra.mxu0 0
    %970 = vmatprep.subr.bf16.mxu0 0
    %971 = vmatpush1.bf16.msra.mxu0 0
    %972 = vmatprep.mubr.bf16.mxu0 0
    %973 = vmatmul.mubr.bf16.gmra.mrb[0].mxu0 %v938
    %v974 = vpop.f32.mrb[0].mxu0
    %v975 = vadd.f32 %v923, %v974
    %v976 = vpop.f32.mrb[0].mxu0
    %v977 = vpop.f32.mrb[0].mxu0
    %v978 = vadd.f32 %v923, %v977
    %v979 = vpop.f32.mrb[0].mxu0
    %980 = vdwg.mxu0
    %v981 = vmul.f32 %v975, 0.70710677
    %v982 = vmul.f32 %v978, 0.70710677
    %v983 = vand.u32 2147483647, %v981
    %v984 = vand.u32 2147483647, %v982
    %v985 = vmul.f32 %v983, 0.3275911
    %v986 = vmul.f32 %v984, 0.3275911
    %v987 = vadd.f32 %v985, 1.0
    %v988 = vadd.f32 %v986, 1.0
    %v989 = vrcp.pop %v987
    %v990 = vmul.f32 1.0, %v989
    %v991 = vrcp.pop %v988
    %v992 = vmul.f32 1.0, %v991
    %v993 = vmul.f32 %v990, 1.0614054
    %v994 = vmul.f32 %v992, 1.0614054
    %v995 = vsub.f32 %v993, 1.4531521
    %v996 = vsub.f32 %v994, 1.4531521
    %v997 = vmul.f32 %v995, %v990
    %v998 = vmul.f32 %v996, %v992
    %v999 = vadd.f32 %v997, 1.4214138
    %v1000 = vadd.f32 %v998, 1.4214138
    %v1001 = vmul.f32 %v999, %v990
    %v1002 = vmul.f32 %v1000, %v992
    %v1003 = vsub.f32 %v1001, 0.28449672
    %v1004 = vsub.f32 %v1002, 0.28449672
    %v1005 = vmul.f32 %v1003, %v990
    %v1006 = vmul.f32 %v1004, %v992
    %v1007 = vadd.f32 %v1005, 0.2548296
    %v1008 = vadd.f32 %v1006, 0.2548296
    %v1009 = vmul.f32 %v1007, %v990
    %v1010 = vmul.f32 %v1008, %v992
    %v1011 = vsub.f32 0.0, %v983
    %v1012 = vsub.f32 0.0, %v984
    %v1013 = vmul.f32 %v1011, %v983
    %v1014 = vmul.f32 %v1012, %v984
    %v1015 = vmul.f32 %v1013, 1.442695
    %v1016 = vpow.pop %v1015
    %v1017 = vmul.f32 %v1014, 1.442695
    %v1018 = vpow.pop %v1017
    %v1019 = vmul.f32 %v1009, %v1016
    %v1020 = vmul.f32 %v1010, %v1018
    %v1021 = vsub.f32 1.0, %v1019
    %v1022 = vsub.f32 1.0, %v1020
    %vm1023 = vcmp.ge.f32.partialorder %v981, 0.0
    %vm1024 = vcmp.ge.f32.partialorder %v982, 0.0
    %v1025 = vsub.f32 0.0, %v1021
    %v1026 = vsub.f32 0.0, %v1022
    %v1027 = vsel %vm1023, %v1021, %v1025
    %v1028 = vsel %vm1024, %v1022, %v1026
    %v1029 = vmul.f32 %v975, 0.5
    %v1030 = vmul.f32 %v978, 0.5
    %v1031 = vadd.f32 %v1027, 1.0
    %v1032 = vadd.f32 %v1028, 1.0
    %v1033 = vmul.f32 %v1029, %v1031
    %v1034 = vmul.f32 %v1030, %v1032
    %v1035 = vpack.c.bf16 %v1034, %v1033
    %v1036 = vld [vmem:[%s6] sm:$0xf]
    %v1037 = vld [vmem:[%s6 + $0x4] sm:$0xf]
    %v1038 = vld [vmem:[%s6 + $0x8] sm:$0xf]
    %v1039 = vld [vmem:[%s6 + $0xc] sm:$0xf]
    %v1040 = vld [vmem:[%s6 + $0x10] sm:$0xf]
    %v1041 = vld [vmem:[%s6 + $0x14] sm:$0xf]
    %v1042 = vld [vmem:[%s6 + $0x18] sm:$0xf]
    %v1043 = vld [vmem:[%s6 + $0x1c] sm:$0xf]
    %v1044 = vlaneseq
    %v1045 = vshrl.u32 %v1044, 7
    %v1046 = vsub.s32 5, %v1045
    %v1047 = vrot.slane %v43, %v1046
    %v1056 = vunpack.c.l.b16 %v1036
    %v1057 = vunpack.c.l.b16 %v1037
    %v1058 = vunpack.c.l.b16 %v1038
    %v1059 = vunpack.c.l.b16 %v1039
    %v1060 = vunpack.c.l.b16 %v1040
    %v1061 = vunpack.c.l.b16 %v1041
    %v1062 = vunpack.c.l.b16 %v1042
    %v1063 = vunpack.c.l.b16 %v1043
    %v1064 = vpack.c.b16 %v1057, %v1056
    %v1065 = vpack.c.b16 %v1059, %v1058
    %v1066 = vpack.c.b16 %v1061, %v1060
    %v1067 = vpack.c.b16 %v1063, %v1062
    %vm1072 = vcmask 523264
    %v1074 = vsel %vm1072, %v1035, 0
    %1076 = vmatprep.subr.bf16.mxu0 0
    %1077 = vmatpush1.bf16.msra.mxu0 %v1064
    %1078 = vmatprep.subr.bf16.mxu0 0
    %1079 = vmatpush1.bf16.msra.mxu0 %v1065
    %1080 = vmatprep.subr.bf16.mxu0 0
    %1081 = vmatpush1.bf16.msra.mxu0 %v1066
    %1082 = vmatprep.subr.bf16.mxu0 0
    %1083 = vmatpush1.bf16.msra.mxu0 %v1067
    %1084 = vmatprep.subr.bf16.mxu0 0
    %1085 = vmatpush1.bf16.msra.mxu0 0
    %1086 = vmatprep.subr.bf16.mxu0 0
    %1087 = vmatpush1.bf16.msra.mxu0 0
    %1088 = vmatprep.subr.bf16.mxu0 0
    %1089 = vmatpush1.bf16.msra.mxu0 0
    %1090 = vmatprep.subr.bf16.mxu0 0
    %1091 = vmatpush1.bf16.msra.mxu0 0
    %1092 = vmatprep.subr.bf16.mxu0 0
    %1093 = vmatpush1.bf16.msra.mxu0 0
    %1094 = vmatprep.subr.bf16.mxu0 0
    %1095 = vmatpush1.bf16.msra.mxu0 0
    %1096 = vmatprep.subr.bf16.mxu0 0
    %1097 = vmatpush1.bf16.msra.mxu0 0
    %1098 = vmatprep.subr.bf16.mxu0 0
    %1099 = vmatpush1.bf16.msra.mxu0 0
    %1100 = vmatprep.subr.bf16.mxu0 0
    %1101 = vmatpush1.bf16.msra.mxu0 0
    %1102 = vmatprep.subr.bf16.mxu0 0
    %1103 = vmatpush1.bf16.msra.mxu0 0
    %1104 = vmatprep.subr.bf16.mxu0 0
    %1105 = vmatpush1.bf16.msra.mxu0 0
    %1106 = vmatprep.subr.bf16.mxu0 0
    %1107 = vmatpush1.bf16.msra.mxu0 0
    %1108 = vmatprep.mubr.bf16.mxu0 0
    %1109 = vmatmul.mubr.bf16.gmra.mrb[0].mxu0 %v1074
    %v1110 = vpop.f32.mrb[0].mxu0
    %v1111 = vadd.f32 %v1047, %v1110
    %v1112 = vpop.f32.mrb[0].mxu0
    %v1113 = vpop.f32.mrb[0].mxu0
    %v1114 = vadd.f32 %v1047, %v1113
    %v1115 = vpop.f32.mrb[0].mxu0
    %1116 = vdwg.mxu0
    %v1117 = vadd.f32 %v873, %v1111
    %v1118 = vadd.f32 %v874, %v1114
    %v1119 = vmul.f32 %v1117, %v866
    %v1120 = vmul.f32 %v1118, %v871
    %1121 = vst.msk [vmem:[#allocation2] sm:$0xff] %vm44, %v1119
    %1122 = vst.msk [vmem:[#allocation2 + $0x8] sm:$0xff] %vm44, %v1120
    // Predicated region
    $region42: #{transformer_block.1} parent=1 // pred_check
      _
    $region43: #{transformer_block.1} parent=1 // pred_check_branch
      %1124 = sbr.rel (0) target = $region45
    $region44: #{transformer_block.1} parent=1 // pred_region
      %s1126 = ssub.s32 256, 256
      %1127 = vsyncadd [#allocation3], %s1126
      %s1128 = sshll.u32 [#allocation2], 4
      %s1129 = int_to_ptr.vmem [resolvable:$true] %s1128
      %1134 = dma.vmem_to_hbm [thread:$0]  %s1129, 256, %s10, [#allocation3], 128, 128, 8
    $region45: #{transformer_block.1} parent=1 // pred_fallthru
      _
    // Predicated region
    $region46: #{transformer_block.1} parent=1 // pred_check
      _
    $region47: #{transformer_block.1} parent=1 // pred_check_branch
      %1136 = sbr.rel (0) target = $region49
    $region48: #{transformer_block.1} parent=1 // pred_region
      %1137 = dma.done [#allocation3], 256
    $region49: #{transformer_block.1} parent=1 // pred_fallthru
      _
    %1138 = vsyncpa [#allocation3], 1

</llo_original>
